<compile_context>
chip_gen: v7x
topology: tpu7x:2x2x1
jax: 0.10.0
libtpu: 0.0.40
codegen_flags: <defaults>
</compile_context>

<pallas_src>
import functools

import jax
import jax.numpy as jnp
from jax.experimental import pallas as pl
from jax.experimental.pallas import tpu as pltpu


def _round_up(n: int, m: int) -> int:
    return ((n + m - 1) // m) * m


# --------------------------- fused forward kernel ---------------------------
def fused_lstm_fc_kernel(x_ref, wih_ref, whh_ref, b_ref, wfc_ref, bfc_ref,
                         out_ref, *, T, B, O, G):
    f32 = jnp.float32

    # (1) Input projection for ALL timesteps in one matmul (bias folded in).
    #     x_ref is time-major flat: row index = t*B + b.
    gx = (jnp.dot(x_ref[...], wih_ref[...], preferred_element_type=f32)
          + b_ref[...])                                       # (T*B, 4G)

    whh = whh_ref[...]                                        # (G, 4G), resident

    # (2) Recurrence: statically unrolled; per step only h @ W_hh + gate math.
    h = jnp.zeros((B, G), f32)
    c = jnp.zeros((B, G), f32)
    hs = []
    for t in range(T):
        gates = gx[t * B:(t + 1) * B, :] + jnp.dot(
            h, whh, preferred_element_type=f32)               # (B, 4G)
        # PyTorch gate order [i, f, g, o]; each gate padded to G lanes (128-aligned).
        i_g = jax.nn.sigmoid(gates[:, 0 * G:1 * G])
        f_g = jax.nn.sigmoid(gates[:, 1 * G:2 * G])
        g_g = jnp.tanh(gates[:, 2 * G:3 * G])
        o_g = jax.nn.sigmoid(gates[:, 3 * G:4 * G])
        c = f_g * c + i_g * g_g
        h = o_g * jnp.tanh(c)
        hs.append(h)

    # (3) FC + LogSoftmax on all T*B rows at once (rows are independent; the
    #     batch-major ordering is handled at the store below).
    h_all = jnp.concatenate(hs, axis=0)                       # (T*B, G)
    logits = (jnp.dot(h_all, wfc_ref[...], preferred_element_type=f32)
              + bfc_ref[...])                                 # (T*B, O_pad)
    col = jax.lax.broadcasted_iota(jnp.int32, logits.shape, 1)
    logits = jnp.where(col < O, logits, -1e30)                # mask padded lanes
    m = jnp.max(logits, axis=-1, keepdims=True)
    shifted = logits - m
    lse = jnp.log(jnp.sum(jnp.exp(shifted), axis=-1, keepdims=True))
    logp = shifted - lse                                      # (T*B, O_pad)

    # (4) Store batch-major: out[b, t, :] = logp[t*B + b, :]  (static indices).
    for t in range(T):
        out_ref[:, t, :] = logp[t * B:(t + 1) * B, :]


# ----------------------- parameter padding (done once) ----------------------
def _pad_gate_cols(w, H, G):
    """(rows, 4H) -> (rows, 4G): gate k occupies lanes [k*G, k*G + H)."""
    rows = w.shape[0]
    out = jnp.zeros((rows, 4 * G), w.dtype)
    for k in range(4):
        out = out.at[:, k * G:k * G + H].set(w[:, k * H:(k + 1) * H])
    return out


def _pad_params(params, H, O, G, O_pad):
    w_ih_p = _pad_gate_cols(params["w_ih_t"], H, G)                      # (D, 4G)
    w_hh_p = jnp.zeros((G, 4 * G), jnp.float32)
    w_hh_p = w_hh_p.at[:H, :].set(_pad_gate_cols(params["w_hh_t"], H, G))  # (G, 4G)
    b_p = _pad_gate_cols(params["b_lstm"], H, G)                         # (1, 4G)
    w_fc_p = jnp.zeros((G, O_pad), jnp.float32).at[:H, :O].set(params["w_fc_t"])
    b_fc_p = jnp.zeros((1, O_pad), jnp.float32).at[:, :O].set(params["b_fc"])
    return w_ih_p, w_hh_p, b_p, w_fc_p, b_fc_p


# ------------------------------ full forward --------------------------------
def module_id_based_rnn_forward(x, params):
    """x: (B, T, D_in) float32 -> (B*T, output_dim) log-probabilities."""
    B, T, D = x.shape
    H = params["w_hh_t"].shape[0]
    O = params["w_fc_t"].shape[1]
    G = _round_up(H, 128)       # per-gate padded lane width
    O_pad = _round_up(O, 128)   # padded output lane width

    w_ih_p, w_hh_p, b_p, w_fc_p, b_fc_p = _pad_params(params, H, O, G, O_pad)

    # Time-major flat input (row = t*B + b): one tiny XLA transpose of the raw
    # input so the per-step gate slice inside the kernel is a contiguous block.
    x_tb = jnp.transpose(x, (1, 0, 2)).reshape(T * B, D)

    kernel = functools.partial(fused_lstm_fc_kernel, T=T, B=B, O=O, G=G)
    out_pad = pl.pallas_call(
        kernel,
        out_shape=jax.ShapeDtypeStruct((B, T, O_pad), jnp.float32),
        grid=(1,),
        in_specs=[
            pl.BlockSpec((T * B, D), lambda i: (0, 0)),       # x (time-major flat)
            pl.BlockSpec((D, 4 * G), lambda i: (0, 0)),       # W_ih^T (gate-padded)
            pl.BlockSpec((G, 4 * G), lambda i: (0, 0)),       # W_hh^T (gate-padded)
            pl.BlockSpec((1, 4 * G), lambda i: (0, 0)),       # b_ih + b_hh (padded)
            pl.BlockSpec((G, O_pad), lambda i: (0, 0)),       # W_fc^T (padded)
            pl.BlockSpec((1, O_pad), lambda i: (0, 0)),       # b_fc (padded)
        ],
        out_specs=pl.BlockSpec((B, T, O_pad), lambda i: (0, 0, 0)),
        compiler_params=pltpu.CompilerParams(
            dimension_semantics=("arbitrary",),
        ),
    )(x_tb, w_ih_p, w_hh_p, b_p, w_fc_p, b_fc_p)

    # (B, T, O_pad) -> (B*T, O_pad) matches PyTorch out.contiguous().view(-1, H)
    # row ordering; strip the padded output lanes.
    return out_pad.reshape(B * T, O_pad)[:, :O]


# ----------------------------- pure-JAX reference ---------------------------
def reference_forward(x, params):
    B, T, D = x.shape
    H = params["w_hh_t"].shape[0]
    w_ih_t, w_hh_t, b = params["w_ih_t"], params["w_hh_t"], params["b_lstm"][0]
    h = jnp.zeros((B, H), jnp.float32)
    c = jnp.zeros((B, H), jnp.float32)
    outs = []
    for t in range(T):
        gates = x[:, t, :] @ w_ih_t + h @ w_hh_t + b
        i_g = jax.nn.sigmoid(gates[:, 0 * H:1 * H])
        f_g = jax.nn.sigmoid(gates[:, 1 * H:2 * H])
        g_g = jnp.tanh(gates[:, 2 * H:3 * H])
        o_g = jax.nn.sigmoid(gates[:, 3 * H:4 * H])
        c = f_g * c + i_g * g_g
        h = o_g * jnp.tanh(c)
        outs.append(h)
    out = jnp.stack(outs, axis=1).reshape(B * T, H)
    logits = out @ params["w_fc_t"] + params["b_fc"][0]
    return jax.nn.log_softmax(logits, axis=1)


# ---------------------------------- main -------------------------------------
if __name__ == "__main__":
    # module defaults: input_dim=10, hidden_dim=20, output_dim=10
    B, T, D_in, H, O = 8, 4, 10, 20, 10

    key = jax.random.PRNGKey(0)
    k_x, k1, k2, k3, k4, k5, k6 = jax.random.split(key, 7)

    scale = 1.0 / jnp.sqrt(H)  # PyTorch default uniform(-1/sqrt(H), 1/sqrt(H))
    params = {
        # stored pre-transposed for MXU-friendly (in, out) matmuls
        "w_ih_t": jax.random.uniform(k1, (D_in, 4 * H), jnp.float32, -scale, scale),
        "w_hh_t": jax.random.uniform(k2, (H, 4 * H), jnp.float32, -scale, scale),
        "b_lstm": (
            jax.random.uniform(k3, (1, 4 * H), jnp.float32, -scale, scale)
            + jax.random.uniform(k4, (1, 4 * H), jnp.float32, -scale, scale)
        ),  # b_ih + b_hh
        "w_fc_t": jax.random.uniform(k5, (H, O), jnp.float32, -scale, scale),
        "b_fc": jax.random.uniform(k6, (1, O), jnp.float32, -scale, scale),
    }

    x = jax.random.normal(k_x, (B, T, D_in), jnp.float32)

    out = jax.block_until_ready(jax.jit(module_id_based_rnn_forward)(x, params))
    ref = reference_forward(x, params)

    assert out.shape == (B * T, O)
    assert jnp.allclose(out, ref, atol=2e-5, rtol=2e-5), "mismatch vs pure-JAX reference"
    print("KERNEL_OK")
</pallas_src>

<mosaic_0001>
module attributes {stable_mosaic.version = 11 : i64} {
  func.func @fused_lstm_fc_kernel(%arg0: i32, %arg1: memref<32x10xf32, #tpu.memory_space<vmem>>, %arg2: memref<10x512xf32, #tpu.memory_space<vmem>>, %arg3: memref<128x512xf32, #tpu.memory_space<vmem>>, %arg4: memref<1x512xf32, #tpu.memory_space<vmem>>, %arg5: memref<128x128xf32, #tpu.memory_space<vmem>>, %arg6: memref<1x128xf32, #tpu.memory_space<vmem>>, %arg7: memref<8x4x128xf32, #tpu.memory_space<vmem>>) attributes {dimension_semantics = [#tpu.dimension_semantics<arbitrary>], iteration_bounds = array<i64: 1>, scalar_prefetch = 0 : i64, scratch_operands = 0 : i64, tpu.core_type = #tpu.core_type<tc>, window_params = [{pipeline_mode = #tpu.pipeline_mode<synchronous>, transform_indices = @transform_0, window_bounds = array<i64: 32, 10>}, {pipeline_mode = #tpu.pipeline_mode<synchronous>, transform_indices = @transform_1, window_bounds = array<i64: 10, 512>}, {pipeline_mode = #tpu.pipeline_mode<synchronous>, transform_indices = @transform_2, window_bounds = array<i64: 128, 512>}, {pipeline_mode = #tpu.pipeline_mode<synchronous>, transform_indices = @transform_3, window_bounds = array<i64: 1, 512>}, {pipeline_mode = #tpu.pipeline_mode<synchronous>, transform_indices = @transform_4, window_bounds = array<i64: 128, 128>}, {pipeline_mode = #tpu.pipeline_mode<synchronous>, transform_indices = @transform_5, window_bounds = array<i64: 1, 128>}, {pipeline_mode = #tpu.pipeline_mode<synchronous>, transform_indices = @transform_6, window_bounds = array<i64: 8, 4, 128>}]} {
    %c0 = arith.constant 0 : index
    %c0_0 = arith.constant 0 : index
    %0 = vector.load %arg1[%c0, %c0_0] : memref<32x10xf32, #tpu.memory_space<vmem>>, vector<32x10xf32>
    %c0_1 = arith.constant 0 : index
    %c0_2 = arith.constant 0 : index
    %1 = vector.load %arg2[%c0_1, %c0_2] : memref<10x512xf32, #tpu.memory_space<vmem>>, vector<10x512xf32>
    %cst = arith.constant dense<0.000000e+00> : vector<32x512xf32>
    %2 = tpu.matmul %0, %1, %cst {dimension_numbers = #tpu.dot_dimension_numbers<[1], [0], [0], [1], [0, 0, 1, 1], [], []>} : vector<32x10xf32>, vector<10x512xf32>, vector<32x512xf32> -> vector<32x512xf32>
    %c0_3 = arith.constant 0 : index
    %c0_4 = arith.constant 0 : index
    %3 = vector.load %arg4[%c0_3, %c0_4] : memref<1x512xf32, #tpu.memory_space<vmem>>, vector<1x512xf32>
    %4 = vector.broadcast %3 : vector<1x512xf32> to vector<32x512xf32>
    %5 = arith.addf %2, %4 : vector<32x512xf32>
    %c0_5 = arith.constant 0 : index
    %c0_6 = arith.constant 0 : index
    %6 = vector.load %arg3[%c0_5, %c0_6] : memref<128x512xf32, #tpu.memory_space<vmem>>, vector<128x512xf32>
    %cst_7 = arith.constant 0.000000e+00 : f32
    %7 = vector.broadcast %cst_7 : f32 to vector<8x128xf32>
    %cst_8 = arith.constant 0.000000e+00 : f32
    %8 = vector.broadcast %cst_8 : f32 to vector<8x128xf32>
    %9 = vector.extract_strided_slice %5 {offsets = [0, 0], sizes = [8, 512], strides = [1, 1]} : vector<32x512xf32> to vector<8x512xf32>
    %cst_9 = arith.constant dense<0.000000e+00> : vector<8x512xf32>
    %10 = tpu.matmul %7, %6, %cst_9 {dimension_numbers = #tpu.dot_dimension_numbers<[1], [0], [0], [1], [0, 0, 1, 1], [], []>} : vector<8x128xf32>, vector<128x512xf32>, vector<8x512xf32> -> vector<8x512xf32>
    %11 = arith.addf %9, %10 : vector<8x512xf32>
    %12 = vector.extract_strided_slice %11 {offsets = [0, 0], sizes = [8, 128], strides = [1, 1]} : vector<8x512xf32> to vector<8x128xf32>
    %13 = arith.negf %12 : vector<8x128xf32>
    %14 = math.exp %13 : vector<8x128xf32>
    %cst_10 = arith.constant 1.000000e+00 : f32
    %15 = vector.broadcast %cst_10 : f32 to vector<8x128xf32>
    %16 = arith.addf %15, %14 : vector<8x128xf32>
    %17 = arith.divf %15, %16 : vector<8x128xf32>
    %18 = vector.extract_strided_slice %11 {offsets = [0, 128], sizes = [8, 128], strides = [1, 1]} : vector<8x512xf32> to vector<8x128xf32>
    %19 = arith.negf %18 : vector<8x128xf32>
    %20 = math.exp %19 : vector<8x128xf32>
    %cst_11 = arith.constant 1.000000e+00 : f32
    %21 = vector.broadcast %cst_11 : f32 to vector<8x128xf32>
    %22 = arith.addf %21, %20 : vector<8x128xf32>
    %23 = arith.divf %21, %22 : vector<8x128xf32>
    %24 = vector.extract_strided_slice %11 {offsets = [0, 256], sizes = [8, 128], strides = [1, 1]} : vector<8x512xf32> to vector<8x128xf32>
    %25 = math.tanh %24 : vector<8x128xf32>
    %26 = vector.extract_strided_slice %11 {offsets = [0, 384], sizes = [8, 128], strides = [1, 1]} : vector<8x512xf32> to vector<8x128xf32>
    %27 = arith.negf %26 : vector<8x128xf32>
    %28 = math.exp %27 : vector<8x128xf32>
    %cst_12 = arith.constant 1.000000e+00 : f32
    %29 = vector.broadcast %cst_12 : f32 to vector<8x128xf32>
    %30 = arith.addf %29, %28 : vector<8x128xf32>
    %31 = arith.divf %29, %30 : vector<8x128xf32>
    %32 = arith.mulf %23, %8 : vector<8x128xf32>
    %33 = arith.mulf %17, %25 : vector<8x128xf32>
    %34 = arith.addf %32, %33 : vector<8x128xf32>
    %35 = math.tanh %34 : vector<8x128xf32>
    %36 = arith.mulf %31, %35 : vector<8x128xf32>
    %37 = vector.extract_strided_slice %5 {offsets = [8, 0], sizes = [8, 512], strides = [1, 1]} : vector<32x512xf32> to vector<8x512xf32>
    %cst_13 = arith.constant dense<0.000000e+00> : vector<8x512xf32>
    %38 = tpu.matmul %36, %6, %cst_13 {dimension_numbers = #tpu.dot_dimension_numbers<[1], [0], [0], [1], [0, 0, 1, 1], [], []>} : vector<8x128xf32>, vector<128x512xf32>, vector<8x512xf32> -> vector<8x512xf32>
    %39 = arith.addf %37, %38 : vector<8x512xf32>
    %40 = vector.extract_strided_slice %39 {offsets = [0, 0], sizes = [8, 128], strides = [1, 1]} : vector<8x512xf32> to vector<8x128xf32>
    %41 = arith.negf %40 : vector<8x128xf32>
    %42 = math.exp %41 : vector<8x128xf32>
    %cst_14 = arith.constant 1.000000e+00 : f32
    %43 = vector.broadcast %cst_14 : f32 to vector<8x128xf32>
    %44 = arith.addf %43, %42 : vector<8x128xf32>
    %45 = arith.divf %43, %44 : vector<8x128xf32>
    %46 = vector.extract_strided_slice %39 {offsets = [0, 128], sizes = [8, 128], strides = [1, 1]} : vector<8x512xf32> to vector<8x128xf32>
    %47 = arith.negf %46 : vector<8x128xf32>
    %48 = math.exp %47 : vector<8x128xf32>
    %cst_15 = arith.constant 1.000000e+00 : f32
    %49 = vector.broadcast %cst_15 : f32 to vector<8x128xf32>
    %50 = arith.addf %49, %48 : vector<8x128xf32>
    %51 = arith.divf %49, %50 : vector<8x128xf32>
    %52 = vector.extract_strided_slice %39 {offsets = [0, 256], sizes = [8, 128], strides = [1, 1]} : vector<8x512xf32> to vector<8x128xf32>
    %53 = math.tanh %52 : vector<8x128xf32>
    %54 = vector.extract_strided_slice %39 {offsets = [0, 384], sizes = [8, 128], strides = [1, 1]} : vector<8x512xf32> to vector<8x128xf32>
    %55 = arith.negf %54 : vector<8x128xf32>
    %56 = math.exp %55 : vector<8x128xf32>
    %cst_16 = arith.constant 1.000000e+00 : f32
    %57 = vector.broadcast %cst_16 : f32 to vector<8x128xf32>
    %58 = arith.addf %57, %56 : vector<8x128xf32>
    %59 = arith.divf %57, %58 : vector<8x128xf32>
    %60 = arith.mulf %51, %34 : vector<8x128xf32>
    %61 = arith.mulf %45, %53 : vector<8x128xf32>
    %62 = arith.addf %60, %61 : vector<8x128xf32>
    %63 = math.tanh %62 : vector<8x128xf32>
    %64 = arith.mulf %59, %63 : vector<8x128xf32>
    %65 = vector.extract_strided_slice %5 {offsets = [16, 0], sizes = [8, 512], strides = [1, 1]} : vector<32x512xf32> to vector<8x512xf32>
    %cst_17 = arith.constant dense<0.000000e+00> : vector<8x512xf32>
    %66 = tpu.matmul %64, %6, %cst_17 {dimension_numbers = #tpu.dot_dimension_numbers<[1], [0], [0], [1], [0, 0, 1, 1], [], []>} : vector<8x128xf32>, vector<128x512xf32>, vector<8x512xf32> -> vector<8x512xf32>
    %67 = arith.addf %65, %66 : vector<8x512xf32>
    %68 = vector.extract_strided_slice %67 {offsets = [0, 0], sizes = [8, 128], strides = [1, 1]} : vector<8x512xf32> to vector<8x128xf32>
    %69 = arith.negf %68 : vector<8x128xf32>
    %70 = math.exp %69 : vector<8x128xf32>
    %cst_18 = arith.constant 1.000000e+00 : f32
    %71 = vector.broadcast %cst_18 : f32 to vector<8x128xf32>
    %72 = arith.addf %71, %70 : vector<8x128xf32>
    %73 = arith.divf %71, %72 : vector<8x128xf32>
    %74 = vector.extract_strided_slice %67 {offsets = [0, 128], sizes = [8, 128], strides = [1, 1]} : vector<8x512xf32> to vector<8x128xf32>
    %75 = arith.negf %74 : vector<8x128xf32>
    %76 = math.exp %75 : vector<8x128xf32>
    %cst_19 = arith.constant 1.000000e+00 : f32
    %77 = vector.broadcast %cst_19 : f32 to vector<8x128xf32>
    %78 = arith.addf %77, %76 : vector<8x128xf32>
    %79 = arith.divf %77, %78 : vector<8x128xf32>
    %80 = vector.extract_strided_slice %67 {offsets = [0, 256], sizes = [8, 128], strides = [1, 1]} : vector<8x512xf32> to vector<8x128xf32>
    %81 = math.tanh %80 : vector<8x128xf32>
    %82 = vector.extract_strided_slice %67 {offsets = [0, 384], sizes = [8, 128], strides = [1, 1]} : vector<8x512xf32> to vector<8x128xf32>
    %83 = arith.negf %82 : vector<8x128xf32>
    %84 = math.exp %83 : vector<8x128xf32>
    %cst_20 = arith.constant 1.000000e+00 : f32
    %85 = vector.broadcast %cst_20 : f32 to vector<8x128xf32>
    %86 = arith.addf %85, %84 : vector<8x128xf32>
    %87 = arith.divf %85, %86 : vector<8x128xf32>
    %88 = arith.mulf %79, %62 : vector<8x128xf32>
    %89 = arith.mulf %73, %81 : vector<8x128xf32>
    %90 = arith.addf %88, %89 : vector<8x128xf32>
    %91 = math.tanh %90 : vector<8x128xf32>
    %92 = arith.mulf %87, %91 : vector<8x128xf32>
    %93 = vector.extract_strided_slice %5 {offsets = [24, 0], sizes = [8, 512], strides = [1, 1]} : vector<32x512xf32> to vector<8x512xf32>
    %cst_21 = arith.constant dense<0.000000e+00> : vector<8x512xf32>
    %94 = tpu.matmul %92, %6, %cst_21 {dimension_numbers = #tpu.dot_dimension_numbers<[1], [0], [0], [1], [0, 0, 1, 1], [], []>} : vector<8x128xf32>, vector<128x512xf32>, vector<8x512xf32> -> vector<8x512xf32>
    %95 = arith.addf %93, %94 : vector<8x512xf32>
    %96 = vector.extract_strided_slice %95 {offsets = [0, 0], sizes = [8, 128], strides = [1, 1]} : vector<8x512xf32> to vector<8x128xf32>
    %97 = arith.negf %96 : vector<8x128xf32>
    %98 = math.exp %97 : vector<8x128xf32>
    %cst_22 = arith.constant 1.000000e+00 : f32
    %99 = vector.broadcast %cst_22 : f32 to vector<8x128xf32>
    %100 = arith.addf %99, %98 : vector<8x128xf32>
    %101 = arith.divf %99, %100 : vector<8x128xf32>
    %102 = vector.extract_strided_slice %95 {offsets = [0, 128], sizes = [8, 128], strides = [1, 1]} : vector<8x512xf32> to vector<8x128xf32>
    %103 = arith.negf %102 : vector<8x128xf32>
    %104 = math.exp %103 : vector<8x128xf32>
    %cst_23 = arith.constant 1.000000e+00 : f32
    %105 = vector.broadcast %cst_23 : f32 to vector<8x128xf32>
    %106 = arith.addf %105, %104 : vector<8x128xf32>
    %107 = arith.divf %105, %106 : vector<8x128xf32>
    %108 = vector.extract_strided_slice %95 {offsets = [0, 256], sizes = [8, 128], strides = [1, 1]} : vector<8x512xf32> to vector<8x128xf32>
    %109 = math.tanh %108 : vector<8x128xf32>
    %110 = vector.extract_strided_slice %95 {offsets = [0, 384], sizes = [8, 128], strides = [1, 1]} : vector<8x512xf32> to vector<8x128xf32>
    %111 = arith.negf %110 : vector<8x128xf32>
    %112 = math.exp %111 : vector<8x128xf32>
    %cst_24 = arith.constant 1.000000e+00 : f32
    %113 = vector.broadcast %cst_24 : f32 to vector<8x128xf32>
    %114 = arith.addf %113, %112 : vector<8x128xf32>
    %115 = arith.divf %113, %114 : vector<8x128xf32>
    %116 = arith.mulf %107, %90 : vector<8x128xf32>
    %117 = arith.mulf %101, %109 : vector<8x128xf32>
    %118 = arith.addf %116, %117 : vector<8x128xf32>
    %119 = math.tanh %118 : vector<8x128xf32>
    %120 = arith.mulf %115, %119 : vector<8x128xf32>
    %121 = tpu.concatenate %36, %64, %92, %120 in 0 : vector<8x128xf32>, vector<8x128xf32>, vector<8x128xf32>, vector<8x128xf32> -> vector<32x128xf32>
    %c0_25 = arith.constant 0 : index
    %c0_26 = arith.constant 0 : index
    %122 = vector.load %arg5[%c0_25, %c0_26] : memref<128x128xf32, #tpu.memory_space<vmem>>, vector<128x128xf32>
    %cst_27 = arith.constant dense<0.000000e+00> : vector<32x128xf32>
    %123 = tpu.matmul %121, %122, %cst_27 {dimension_numbers = #tpu.dot_dimension_numbers<[1], [0], [0], [1], [0, 0, 1, 1], [], []>} : vector<32x128xf32>, vector<128x128xf32>, vector<32x128xf32> -> vector<32x128xf32>
    %c0_28 = arith.constant 0 : index
    %c0_29 = arith.constant 0 : index
    %124 = vector.load %arg6[%c0_28, %c0_29] : memref<1x128xf32, #tpu.memory_space<vmem>>, vector<1x128xf32>
    %125 = vector.broadcast %124 : vector<1x128xf32> to vector<32x128xf32>
    %126 = arith.addf %123, %125 : vector<32x128xf32>
    %127 = tpu.iota {dimensions = array<i32: 1>} : vector<32x128xi32>
    %c10_i32 = arith.constant 10 : i32
    %128 = vector.broadcast %c10_i32 : i32 to vector<32x128xi32>
    %129 = arith.cmpi slt, %127, %128 : vector<32x128xi32>
    %cst_30 = arith.constant -1.000000e+30 : f32
    %130 = vector.broadcast %cst_30 : f32 to vector<32x128xf32>
    %131 = arith.select %129, %126, %130 : vector<32x128xi1>, vector<32x128xf32>
    %cst_31 = arith.constant dense<0xFF800000> : vector<32xf32>
    %132 = vector.multi_reduction <maximumf>, %131, %cst_31 [1] : vector<32x128xf32> to vector<32xf32>
    %133 = vector.shape_cast %132 : vector<32xf32> to vector<32x1xf32>
    %134 = vector.broadcast %133 : vector<32x1xf32> to vector<32x128xf32>
    %135 = arith.subf %131, %134 : vector<32x128xf32>
    %136 = math.exp %135 : vector<32x128xf32>
    %cst_32 = arith.constant dense<0.000000e+00> : vector<32xf32>
    %137 = vector.multi_reduction <add>, %136, %cst_32 [1] : vector<32x128xf32> to vector<32xf32>
    %138 = vector.shape_cast %137 : vector<32xf32> to vector<32x1xf32>
    %139 = math.log %138 : vector<32x1xf32>
    %140 = vector.broadcast %139 : vector<32x1xf32> to vector<32x128xf32>
    %141 = arith.subf %135, %140 : vector<32x128xf32>
    %142 = vector.extract_strided_slice %141 {offsets = [0, 0], sizes = [8, 128], strides = [1, 1]} : vector<32x128xf32> to vector<8x128xf32>
    %c0_33 = arith.constant 0 : index
    %c0_34 = arith.constant 0 : index
    %c0_35 = arith.constant 0 : index
    %143 = vector.load %arg7[%c0_33, %c0_34, %c0_35] : memref<8x4x128xf32, #tpu.memory_space<vmem>>, vector<8x1x128xf32>
    %144 = vector.shape_cast %143 : vector<8x1x128xf32> to vector<8x128xf32>
    %145 = vector.shape_cast %142 : vector<8x128xf32> to vector<8x1x128xf32>
    tpu.vector_store %arg7[%c0_33, %c0_34, %c0_35], %145 {strides = array<i32>} : memref<8x4x128xf32, #tpu.memory_space<vmem>>, vector<8x1x128xf32>,
    %146 = vector.extract_strided_slice %141 {offsets = [8, 0], sizes = [8, 128], strides = [1, 1]} : vector<32x128xf32> to vector<8x128xf32>
    %c0_36 = arith.constant 0 : index
    %c1 = arith.constant 1 : index
    %c0_37 = arith.constant 0 : index
    %147 = vector.load %arg7[%c0_36, %c1, %c0_37] : memref<8x4x128xf32, #tpu.memory_space<vmem>>, vector<8x1x128xf32>
    %148 = vector.shape_cast %147 : vector<8x1x128xf32> to vector<8x128xf32>
    %149 = vector.shape_cast %146 : vector<8x128xf32> to vector<8x1x128xf32>
    tpu.vector_store %arg7[%c0_36, %c1, %c0_37], %149 {strides = array<i32>} : memref<8x4x128xf32, #tpu.memory_space<vmem>>, vector<8x1x128xf32>,
    %150 = vector.extract_strided_slice %141 {offsets = [16, 0], sizes = [8, 128], strides = [1, 1]} : vector<32x128xf32> to vector<8x128xf32>
    %c0_38 = arith.constant 0 : index
    %c2 = arith.constant 2 : index
    %c0_39 = arith.constant 0 : index
    %151 = vector.load %arg7[%c0_38, %c2, %c0_39] : memref<8x4x128xf32, #tpu.memory_space<vmem>>, vector<8x1x128xf32>
    %152 = vector.shape_cast %151 : vector<8x1x128xf32> to vector<8x128xf32>
    %153 = vector.shape_cast %150 : vector<8x128xf32> to vector<8x1x128xf32>
    tpu.vector_store %arg7[%c0_38, %c2, %c0_39], %153 {strides = array<i32>} : memref<8x4x128xf32, #tpu.memory_space<vmem>>, vector<8x1x128xf32>,
    %154 = vector.extract_strided_slice %141 {offsets = [24, 0], sizes = [8, 128], strides = [1, 1]} : vector<32x128xf32> to vector<8x128xf32>
    %c0_40 = arith.constant 0 : index
    %c3 = arith.constant 3 : index
    %c0_41 = arith.constant 0 : index
    %155 = vector.load %arg7[%c0_40, %c3, %c0_41] : memref<8x4x128xf32, #tpu.memory_space<vmem>>, vector<8x1x128xf32>
    %156 = vector.shape_cast %155 : vector<8x1x128xf32> to vector<8x128xf32>
    %157 = vector.shape_cast %154 : vector<8x128xf32> to vector<8x1x128xf32>
    tpu.vector_store %arg7[%c0_40, %c3, %c0_41], %157 {strides = array<i32>} : memref<8x4x128xf32, #tpu.memory_space<vmem>>, vector<8x1x128xf32>,
    return
  }
  func.func @transform_0(%arg0: i32) -> (i32, i32) {
    %c0_i32 = arith.constant 0 : i32
    %c0_i32_0 = arith.constant 0 : i32
    %c0_i32_1 = arith.constant 0 : i32
    return %c0_i32, %c0_i32_0 : i32, i32
  }
  func.func @transform_1(%arg0: i32) -> (i32, i32) {
    %c0_i32 = arith.constant 0 : i32
    %c0_i32_0 = arith.constant 0 : i32
    %c0_i32_1 = arith.constant 0 : i32
    return %c0_i32, %c0_i32_0 : i32, i32
  }
  func.func @transform_2(%arg0: i32) -> (i32, i32) {
    %c0_i32 = arith.constant 0 : i32
    %c0_i32_0 = arith.constant 0 : i32
    %c0_i32_1 = arith.constant 0 : i32
    return %c0_i32, %c0_i32_0 : i32, i32
  }
  func.func @transform_3(%arg0: i32) -> (i32, i32) {
    %c0_i32 = arith.constant 0 : i32
    %c0_i32_0 = arith.constant 0 : i32
    %c0_i32_1 = arith.constant 0 : i32
    return %c0_i32, %c0_i32_0 : i32, i32
  }
  func.func @transform_4(%arg0: i32) -> (i32, i32) {
    %c0_i32 = arith.constant 0 : i32
    %c0_i32_0 = arith.constant 0 : i32
    %c0_i32_1 = arith.constant 0 : i32
    return %c0_i32, %c0_i32_0 : i32, i32
  }
  func.func @transform_5(%arg0: i32) -> (i32, i32) {
    %c0_i32 = arith.constant 0 : i32
    %c0_i32_0 = arith.constant 0 : i32
    %c0_i32_1 = arith.constant 0 : i32
    return %c0_i32, %c0_i32_0 : i32, i32
  }
  func.func @transform_6(%arg0: i32) -> (i32, i32, i32) {
    %c0_i32 = arith.constant 0 : i32
    %c0_i32_0 = arith.constant 0 : i32
    %c0_i32_1 = arith.constant 0 : i32
    %c0_i32_2 = arith.constant 0 : i32
    return %c0_i32, %c0_i32_0, %c0_i32_1 : i32, i32, i32
  }
}

</mosaic_0001>

<llo_original>
// kernel: module_id_based_rnn_forward.1
$region0: #{module_id_based_rnn_forward.1}
  #allocation0 [shape = 'u32[]', space=smem, size = 0x4, offset = 0x4, fixed_abs, tag = 'smem constant byte address 0x4 - core index']
  #allocation1 [shape = 'u32[144,128]{1,0:T(1,128)}', space=vmem, size = 0x12000, scoped, tag = 'internal scratch']
  %s0 = inlined_call_operand.vmem [shape: f32[32,10], index: 0, kind: input, shape index: {}]
  %s1 = inlined_call_operand.vmem [shape: f32[10,512], index: 1, kind: input, shape index: {}]
  %s2 = inlined_call_operand.vmem [shape: f32[128,512], index: 2, kind: input, shape index: {}]
  %s3 = inlined_call_operand.vmem [shape: f32[1,512], index: 3, kind: input, shape index: {}]
  %s4 = inlined_call_operand.vmem [shape: f32[128,128], index: 4, kind: input, shape index: {}]
  %s5 = inlined_call_operand.vmem [shape: f32[1,128], index: 5, kind: input, shape index: {}]
  %s6 = inlined_call_operand.vmem [shape: f32[8,4,128], index: 6, kind: output, shape index: {}]
  %s7 = sld [smem:[#allocation0]]
  $region34: #{module_id_based_rnn_forward.1} parent=0
    _
  %s9 = ssub.s32 1, %s7
  %s10 = scalar_select 0, %s9, %s7
  // Predicated region
  $region2: #{module_id_based_rnn_forward.1} parent=0 // pred_check
    _
  $region3: #{module_id_based_rnn_forward.1} parent=0 // pred_check_branch
    %12 = sbr.rel (0) target = $region5
  $region4: #{module_id_based_rnn_forward.1} parent=0 // pred_region
    _
  $region5: #{module_id_based_rnn_forward.1} parent=0 // pred_fallthru
    _
  // Predicated region
  $region6: #{module_id_based_rnn_forward.1} parent=0 // pred_check
    _
  $region7: #{module_id_based_rnn_forward.1} parent=0 // pred_check_branch
    %14 = sbr.rel (0) target = $region9
  $region8: #{module_id_based_rnn_forward.1} parent=0 // pred_region
    _
  $region9: #{module_id_based_rnn_forward.1} parent=0 // pred_fallthru
    _
  // Predicated region
  $region10: #{module_id_based_rnn_forward.1} parent=0 // pred_check
    _
  $region11: #{module_id_based_rnn_forward.1} parent=0 // pred_check_branch
    %16 = sbr.rel (0) target = $region13
  $region12: #{module_id_based_rnn_forward.1} parent=0 // pred_region
    _
  $region13: #{module_id_based_rnn_forward.1} parent=0 // pred_fallthru
    _
  // Predicated region
  $region14: #{module_id_based_rnn_forward.1} parent=0 // pred_check
    _
  $region15: #{module_id_based_rnn_forward.1} parent=0 // pred_check_branch
    %18 = sbr.rel (0) target = $region17
  $region16: #{module_id_based_rnn_forward.1} parent=0 // pred_region
    _
  $region17: #{module_id_based_rnn_forward.1} parent=0 // pred_fallthru
    _
  // Predicated region
  $region18: #{module_id_based_rnn_forward.1} parent=0 // pred_check
    _
  $region19: #{module_id_based_rnn_forward.1} parent=0 // pred_check_branch
    %20 = sbr.rel (0) target = $region21
  $region20: #{module_id_based_rnn_forward.1} parent=0 // pred_region
    _
  $region21: #{module_id_based_rnn_forward.1} parent=0 // pred_fallthru
    _
  // Predicated region
  $region22: #{module_id_based_rnn_forward.1} parent=0 // pred_check
    _
  $region23: #{module_id_based_rnn_forward.1} parent=0 // pred_check_branch
    %22 = sbr.rel (0) target = $region25
  $region24: #{module_id_based_rnn_forward.1} parent=0 // pred_region
    _
  $region25: #{module_id_based_rnn_forward.1} parent=0 // pred_fallthru
    _
  %v23 = vld [vmem:[%s0] sm:$0xff]
  %v24 = vld [vmem:[%s0 + $0x8] sm:$0xff]
  %v25 = vld [vmem:[%s0 + $0x10] sm:$0xff]
  %v26 = vld [vmem:[%s0 + $0x18] sm:$0xff]
  %v27 = vld [vmem:[%s1] sm:$0xff]
  %v28 = vld [vmem:[%s1 + $0x8] sm:$0xff]
  %v29 = vld [vmem:[%s1 + $0x10] sm:$0xff]
  %v30 = vld [vmem:[%s1 + $0x18] sm:$0xff]
  %v31 = vld [vmem:[%s1 + $0x20] sm:$0x3]
  %v32 = vld [vmem:[%s1 + $0x28] sm:$0x3]
  %v33 = vld [vmem:[%s1 + $0x30] sm:$0x3]
  %v34 = vld [vmem:[%s1 + $0x38] sm:$0x3]
  %v35 = vld [vmem:[%s3] sm:$0xf]
  %v37 = vlaneseq
  %v38 = vshrl.u32 %v37, 7
  %v39 = vsub.s32 0, %v38
  %v40 = vrot.slane %v35, %v39
  %v41 = vlaneseq
  %v42 = vshrl.u32 %v41, 7
  %v43 = vsub.s32 1, %v42
  %v44 = vrot.slane %v35, %v43
  %v45 = vlaneseq
  %v46 = vshrl.u32 %v45, 7
  %v47 = vsub.s32 2, %v46
  %v48 = vrot.slane %v35, %v47
  %v49 = vlaneseq
  %v50 = vshrl.u32 %v49, 7
  %v51 = vsub.s32 3, %v50
  %v52 = vrot.slane %v35, %v51
  %vm57 = vcmask 80896
  %v59 = vsel %vm57, %v23, 0
  %v62 = vsel %vm57, %v24, 0
  %v65 = vsel %vm57, %v25, 0
  %v68 = vsel %vm57, %v26, 0
  %vm70 = vcmask 1041408
  %v72 = vsel %vm70, %v31, 0
  %v75 = vsel %vm70, %v32, 0
  %v78 = vsel %vm70, %v33, 0
  %v81 = vsel %vm70, %v34, 0
  %83 = vmatprep.subr.mxu0 %v28
  %84 = vmatpush1.msra.mxu0 %v27
  %85 = vmatprep.subr.mxu0 %v75
  %86 = vmatpush1.msra.mxu0 %v72
  %87 = vmatprep.subr.mxu0 0.0
  %88 = vmatpush1.msra.mxu0 0.0
  %89 = vmatprep.subr.mxu0 0.0
  %90 = vmatpush1.msra.mxu0 0.0
  %91 = vmatprep.subr.mxu0 0.0
  %92 = vmatpush1.msra.mxu0 0.0
  %93 = vmatprep.subr.mxu0 0.0
  %94 = vmatpush1.msra.mxu0 0.0
  %95 = vmatprep.subr.mxu0 0.0
  %96 = vmatpush1.msra.mxu0 0.0
  %97 = vmatprep.subr.mxu0 0.0
  %98 = vmatpush1.msra.mxu0 0.0
  %99 = vmatprep.subr.mxu0 0.0
  %100 = vmatpush1.msra.mxu0 0.0
  %101 = vmatprep.subr.mxu0 0.0
  %102 = vmatpush1.msra.mxu0 0.0
  %103 = vmatprep.subr.mxu0 0.0
  %104 = vmatpush1.msra.mxu0 0.0
  %105 = vmatprep.subr.mxu0 0.0
  %106 = vmatpush1.msra.mxu0 0.0
  %107 = vmatprep.subr.mxu0 0.0
  %108 = vmatpush1.msra.mxu0 0.0
  %109 = vmatprep.subr.mxu0 0.0
  %110 = vmatpush1.msra.mxu0 0.0
  %111 = vmatprep.subr.mxu0 0.0
  %112 = vmatpush1.msra.mxu0 0.0
  %113 = vmatprep.subr.mxu0 0.0
  %114 = vmatpush1.msra.mxu0 0.0
  %115 = vmatprep.subr.mxu0 0.0
  %116 = vmatpush1.msra.mxu0 0.0
  %117 = vmatprep.subr.mxu0 0.0
  %118 = vmatpush1.msra.mxu0 0.0
  %119 = vmatprep.subr.mxu0 0.0
  %120 = vmatpush1.msra.mxu0 0.0
  %121 = vmatprep.subr.mxu0 0.0
  %122 = vmatpush1.msra.mxu0 0.0
  %123 = vmatprep.subr.mxu0 0.0
  %124 = vmatpush1.msra.mxu0 0.0
  %125 = vmatprep.subr.mxu0 0.0
  %126 = vmatpush1.msra.mxu0 0.0
  %127 = vmatprep.subr.mxu0 0.0
  %128 = vmatpush1.msra.mxu0 0.0
  %129 = vmatprep.subr.mxu0 0.0
  %130 = vmatpush1.msra.mxu0 0.0
  %131 = vmatprep.subr.mxu0 0.0
  %132 = vmatpush1.msra.mxu0 0.0
  %133 = vmatprep.subr.mxu0 0.0
  %134 = vmatpush1.msra.mxu0 0.0
  %135 = vmatprep.subr.mxu0 0.0
  %136 = vmatpush1.msra.mxu0 0.0
  %137 = vmatprep.subr.mxu0 0.0
  %138 = vmatpush1.msra.mxu0 0.0
  %139 = vmatprep.subr.mxu0 0.0
  %140 = vmatpush1.msra.mxu0 0.0
  %141 = vmatprep.subr.mxu0 0.0
  %142 = vmatpush1.msra.mxu0 0.0
  %143 = vmatprep.subr.mxu0 0.0
  %144 = vmatpush1.msra.mxu0 0.0
  %145 = vmatprep.subr.mxu0 0.0
  %146 = vmatpush1.msra.mxu0 0.0
  %147 = vmatprep.mubr.f32.mxu0 0.0
  %148 = vmatmul.mubr.f32.gmra.mrb[0].mxu0 %v59
  %v149 = vpop.f32.mrb[0].mxu0
  %v150 = vadd.f32 %v40, %v149
  %v151 = vpop.f32.mrb[0].mxu0
  %v152 = vadd.f32 %v44, %v151
  %153 = vmatprep.mubr.f32.mxu0 0.0
  %154 = vmatmul.mubr.f32.gmra.mrb[0].mxu0 %v62
  %v155 = vpop.f32.mrb[0].mxu0
  %v156 = vadd.f32 %v40, %v155
  %v157 = vpop.f32.mrb[0].mxu0
  %v158 = vadd.f32 %v44, %v157
  %159 = vmatprep.mubr.f32.mxu0 0.0
  %160 = vmatmul.mubr.f32.gmra.mrb[0].mxu0 %v65
  %v161 = vpop.f32.mrb[0].mxu0
  %v162 = vadd.f32 %v40, %v161
  %v163 = vpop.f32.mrb[0].mxu0
  %v164 = vadd.f32 %v44, %v163
  %165 = vmatprep.mubr.f32.mxu0 0.0
  %166 = vmatmul.mubr.f32.gmra.mrb[0].mxu0 %v68
  %v167 = vpop.f32.mrb[0].mxu0
  %v168 = vadd.f32 %v40, %v167
  %v169 = vpop.f32.mrb[0].mxu0
  %v170 = vadd.f32 %v44, %v169
  %171 = vdwg.mxu0
  %172 = vmatprep.subr.mxu0 %v30
  %173 = vmatpush1.msra.mxu0 %v29
  %174 = vmatprep.subr.mxu0 %v81
  %175 = vmatpush1.msra.mxu0 %v78
  %176 = vmatprep.subr.mxu0 0.0
  %177 = vmatpush1.msra.mxu0 0.0
  %178 = vmatprep.subr.mxu0 0.0
  %179 = vmatpush1.msra.mxu0 0.0
  %180 = vmatprep.subr.mxu0 0.0
  %181 = vmatpush1.msra.mxu0 0.0
  %182 = vmatprep.subr.mxu0 0.0
  %183 = vmatpush1.msra.mxu0 0.0
  %184 = vmatprep.subr.mxu0 0.0
  %185 = vmatpush1.msra.mxu0 0.0
  %186 = vmatprep.subr.mxu0 0.0
  %187 = vmatpush1.msra.mxu0 0.0
  %188 = vmatprep.subr.mxu0 0.0
  %189 = vmatpush1.msra.mxu0 0.0
  %190 = vmatprep.subr.mxu0 0.0
  %191 = vmatpush1.msra.mxu0 0.0
  %192 = vmatprep.subr.mxu0 0.0
  %193 = vmatpush1.msra.mxu0 0.0
  %194 = vmatprep.subr.mxu0 0.0
  %195 = vmatpush1.msra.mxu0 0.0
  %196 = vmatprep.subr.mxu0 0.0
  %197 = vmatpush1.msra.mxu0 0.0
  %198 = vmatprep.subr.mxu0 0.0
  %199 = vmatpush1.msra.mxu0 0.0
  %200 = vmatprep.subr.mxu0 0.0
  %201 = vmatpush1.msra.mxu0 0.0
  %202 = vmatprep.subr.mxu0 0.0
  %203 = vmatpush1.msra.mxu0 0.0
  %204 = vmatprep.subr.mxu0 0.0
  %205 = vmatpush1.msra.mxu0 0.0
  %206 = vmatprep.subr.mxu0 0.0
  %207 = vmatpush1.msra.mxu0 0.0
  %208 = vmatprep.subr.mxu0 0.0
  %209 = vmatpush1.msra.mxu0 0.0
  %210 = vmatprep.subr.mxu0 0.0
  %211 = vmatpush1.msra.mxu0 0.0
  %212 = vmatprep.subr.mxu0 0.0
  %213 = vmatpush1.msra.mxu0 0.0
  %214 = vmatprep.subr.mxu0 0.0
  %215 = vmatpush1.msra.mxu0 0.0
  %216 = vmatprep.subr.mxu0 0.0
  %217 = vmatpush1.msra.mxu0 0.0
  %218 = vmatprep.subr.mxu0 0.0
  %219 = vmatpush1.msra.mxu0 0.0
  %220 = vmatprep.subr.mxu0 0.0
  %221 = vmatpush1.msra.mxu0 0.0
  %222 = vmatprep.subr.mxu0 0.0
  %223 = vmatpush1.msra.mxu0 0.0
  %224 = vmatprep.subr.mxu0 0.0
  %225 = vmatpush1.msra.mxu0 0.0
  %226 = vmatprep.subr.mxu0 0.0
  %227 = vmatpush1.msra.mxu0 0.0
  %228 = vmatprep.subr.mxu0 0.0
  %229 = vmatpush1.msra.mxu0 0.0
  %230 = vmatprep.subr.mxu0 0.0
  %231 = vmatpush1.msra.mxu0 0.0
  %232 = vmatprep.subr.mxu0 0.0
  %233 = vmatpush1.msra.mxu0 0.0
  %234 = vmatprep.subr.mxu0 0.0
  %235 = vmatpush1.msra.mxu0 0.0
  %236 = vmatprep.mubr.f32.mxu0 0.0
  %237 = vmatmul.mubr.f32.gmra.mrb[0].mxu0 %v59
  %v238 = vpop.f32.mrb[0].mxu0
  %v239 = vadd.f32 %v48, %v238
  %v240 = vpop.f32.mrb[0].mxu0
  %v241 = vadd.f32 %v52, %v240
  %242 = vmatprep.mubr.f32.mxu0 0.0
  %243 = vmatmul.mubr.f32.gmra.mrb[0].mxu0 %v62
  %v244 = vpop.f32.mrb[0].mxu0
  %v245 = vadd.f32 %v48, %v244
  %v246 = vpop.f32.mrb[0].mxu0
  %v247 = vadd.f32 %v52, %v246
  %248 = vmatprep.mubr.f32.mxu0 0.0
  %249 = vmatmul.mubr.f32.gmra.mrb[0].mxu0 %v65
  %v250 = vpop.f32.mrb[0].mxu0
  %v251 = vadd.f32 %v48, %v250
  %v252 = vpop.f32.mrb[0].mxu0
  %v253 = vadd.f32 %v52, %v252
  %254 = vmatprep.mubr.f32.mxu0 0.0
  %255 = vmatmul.mubr.f32.gmra.mrb[0].mxu0 %v68
  %v256 = vpop.f32.mrb[0].mxu0
  %v257 = vadd.f32 %v48, %v256
  %v258 = vpop.f32.mrb[0].mxu0
  %v259 = vadd.f32 %v52, %v258
  %260 = vdwg.mxu0
  %v261 = vld [vmem:[%s2] sm:$0xff]
  %v262 = vld [vmem:[%s2 + $0x8] sm:$0xff]
  %v263 = vld [vmem:[%s2 + $0x10] sm:$0xff]
  %v264 = vld [vmem:[%s2 + $0x18] sm:$0xff]
  %v265 = vld [vmem:[%s2 + $0x20] sm:$0xff]
  %v266 = vld [vmem:[%s2 + $0x28] sm:$0xff]
  %v267 = vld [vmem:[%s2 + $0x30] sm:$0xff]
  %v268 = vld [vmem:[%s2 + $0x38] sm:$0xff]
  %v269 = vld [vmem:[%s2 + $0x40] sm:$0xff]
  %v270 = vld [vmem:[%s2 + $0x48] sm:$0xff]
  %v271 = vld [vmem:[%s2 + $0x50] sm:$0xff]
  %v272 = vld [vmem:[%s2 + $0x58] sm:$0xff]
  %v273 = vld [vmem:[%s2 + $0x60] sm:$0xff]
  %v274 = vld [vmem:[%s2 + $0x68] sm:$0xff]
  %v275 = vld [vmem:[%s2 + $0x70] sm:$0xff]
  %v276 = vld [vmem:[%s2 + $0x78] sm:$0xff]
  %v277 = vld [vmem:[%s2 + $0x80] sm:$0xff]
  %v278 = vld [vmem:[%s2 + $0x88] sm:$0xff]
  %v279 = vld [vmem:[%s2 + $0x90] sm:$0xff]
  %v280 = vld [vmem:[%s2 + $0x98] sm:$0xff]
  %v281 = vld [vmem:[%s2 + $0xa0] sm:$0xff]
  %v282 = vld [vmem:[%s2 + $0xa8] sm:$0xff]
  %v283 = vld [vmem:[%s2 + $0xb0] sm:$0xff]
  %v284 = vld [vmem:[%s2 + $0xb8] sm:$0xff]
  %v285 = vld [vmem:[%s2 + $0xc0] sm:$0xff]
  %v286 = vld [vmem:[%s2 + $0xc8] sm:$0xff]
  %v287 = vld [vmem:[%s2 + $0xd0] sm:$0xff]
  %v288 = vld [vmem:[%s2 + $0xd8] sm:$0xff]
  %v289 = vld [vmem:[%s2 + $0xe0] sm:$0xff]
  %v290 = vld [vmem:[%s2 + $0xe8] sm:$0xff]
  %v291 = vld [vmem:[%s2 + $0xf0] sm:$0xff]
  %v292 = vld [vmem:[%s2 + $0xf8] sm:$0xff]
  %v293 = vld [vmem:[%s2 + $0x100] sm:$0xff]
  %v294 = vld [vmem:[%s2 + $0x108] sm:$0xff]
  %v295 = vld [vmem:[%s2 + $0x110] sm:$0xff]
  %v296 = vld [vmem:[%s2 + $0x118] sm:$0xff]
  %v297 = vld [vmem:[%s2 + $0x120] sm:$0xff]
  %v298 = vld [vmem:[%s2 + $0x128] sm:$0xff]
  %v299 = vld [vmem:[%s2 + $0x130] sm:$0xff]
  %v300 = vld [vmem:[%s2 + $0x138] sm:$0xff]
  %v301 = vld [vmem:[%s2 + $0x140] sm:$0xff]
  %v302 = vld [vmem:[%s2 + $0x148] sm:$0xff]
  %v303 = vld [vmem:[%s2 + $0x150] sm:$0xff]
  %v304 = vld [vmem:[%s2 + $0x158] sm:$0xff]
  %v305 = vld [vmem:[%s2 + $0x160] sm:$0xff]
  %v306 = vld [vmem:[%s2 + $0x168] sm:$0xff]
  %v307 = vld [vmem:[%s2 + $0x170] sm:$0xff]
  %v308 = vld [vmem:[%s2 + $0x178] sm:$0xff]
  %v309 = vld [vmem:[%s2 + $0x180] sm:$0xff]
  %v310 = vld [vmem:[%s2 + $0x188] sm:$0xff]
  %v311 = vld [vmem:[%s2 + $0x190] sm:$0xff]
  %v312 = vld [vmem:[%s2 + $0x198] sm:$0xff]
  %v313 = vld [vmem:[%s2 + $0x1a0] sm:$0xff]
  %v314 = vld [vmem:[%s2 + $0x1a8] sm:$0xff]
  %v315 = vld [vmem:[%s2 + $0x1b0] sm:$0xff]
  %v316 = vld [vmem:[%s2 + $0x1b8] sm:$0xff]
  %v317 = vld [vmem:[%s2 + $0x1c0] sm:$0xff]
  %v318 = vld [vmem:[%s2 + $0x1c8] sm:$0xff]
  %v319 = vld [vmem:[%s2 + $0x1d0] sm:$0xff]
  %v320 = vld [vmem:[%s2 + $0x1d8] sm:$0xff]
  %v321 = vld [vmem:[%s2 + $0x1e0] sm:$0xff]
  %v322 = vld [vmem:[%s2 + $0x1e8] sm:$0xff]
  %v323 = vld [vmem:[%s2 + $0x1f0] sm:$0xff]
  %v324 = vld [vmem:[%s2 + $0x1f8] sm:$0xff]
  %325 = vmatprep.subr.mxu0 %v262
  %326 = vmatpush1.msra.mxu0 %v261
  %327 = vmatprep.subr.mxu0 %v266
  %328 = vmatpush1.msra.mxu0 %v265
  %329 = vmatprep.subr.mxu0 %v270
  %330 = vmatpush1.msra.mxu0 %v269
  %331 = vmatprep.subr.mxu0 %v274
  %332 = vmatpush1.msra.mxu0 %v273
  %333 = vmatprep.subr.mxu0 %v278
  %334 = vmatpush1.msra.mxu0 %v277
  %335 = vmatprep.subr.mxu0 %v282
  %336 = vmatpush1.msra.mxu0 %v281
  %337 = vmatprep.subr.mxu0 %v286
  %338 = vmatpush1.msra.mxu0 %v285
  %339 = vmatprep.subr.mxu0 %v290
  %340 = vmatpush1.msra.mxu0 %v289
  %341 = vmatprep.subr.mxu0 %v294
  %342 = vmatpush1.msra.mxu0 %v293
  %343 = vmatprep.subr.mxu0 %v298
  %344 = vmatpush1.msra.mxu0 %v297
  %345 = vmatprep.subr.mxu0 %v302
  %346 = vmatpush1.msra.mxu0 %v301
  %347 = vmatprep.subr.mxu0 %v306
  %348 = vmatpush1.msra.mxu0 %v305
  %349 = vmatprep.subr.mxu0 %v310
  %350 = vmatpush1.msra.mxu0 %v309
  %351 = vmatprep.subr.mxu0 %v314
  %352 = vmatpush1.msra.mxu0 %v313
  %353 = vmatprep.subr.mxu0 %v318
  %354 = vmatpush1.msra.mxu0 %v317
  %355 = vmatprep.subr.mxu0 %v322
  %356 = vmatpush1.msra.mxu0 %v321
  %357 = vmatprep.subr.mxu0 0.0
  %358 = vmatpush1.msra.mxu0 0.0
  %359 = vmatprep.subr.mxu0 0.0
  %360 = vmatpush1.msra.mxu0 0.0
  %361 = vmatprep.subr.mxu0 0.0
  %362 = vmatpush1.msra.mxu0 0.0
  %363 = vmatprep.subr.mxu0 0.0
  %364 = vmatpush1.msra.mxu0 0.0
  %365 = vmatprep.subr.mxu0 0.0
  %366 = vmatpush1.msra.mxu0 0.0
  %367 = vmatprep.subr.mxu0 0.0
  %368 = vmatpush1.msra.mxu0 0.0
  %369 = vmatprep.subr.mxu0 0.0
  %370 = vmatpush1.msra.mxu0 0.0
  %371 = vmatprep.subr.mxu0 0.0
  %372 = vmatpush1.msra.mxu0 0.0
  %373 = vmatprep.subr.mxu0 0.0
  %374 = vmatpush1.msra.mxu0 0.0
  %375 = vmatprep.subr.mxu0 0.0
  %376 = vmatpush1.msra.mxu0 0.0
  %377 = vmatprep.subr.mxu0 0.0
  %378 = vmatpush1.msra.mxu0 0.0
  %379 = vmatprep.subr.mxu0 0.0
  %380 = vmatpush1.msra.mxu0 0.0
  %381 = vmatprep.subr.mxu0 0.0
  %382 = vmatpush1.msra.mxu0 0.0
  %383 = vmatprep.subr.mxu0 0.0
  %384 = vmatpush1.msra.mxu0 0.0
  %385 = vmatprep.subr.mxu0 0.0
  %386 = vmatpush1.msra.mxu0 0.0
  %387 = vmatprep.subr.mxu0 0.0
  %388 = vmatpush1.msra.mxu0 0.0
  %389 = vmatprep.mubr.f32.mxu0 0.0
  %390 = vmatmul.mubr.f32.gmra.mrb[0].mxu0 0.0
  %v391 = vpop.f32.mrb[0].mxu0
  %v392 = vadd.f32 0.0, %v391
  %v393 = vpop.f32.mrb[0].mxu0
  %v394 = vadd.f32 0.0, %v393
  %395 = vdwg.mxu0
  %396 = vmatprep.subr.mxu0 %v264
  %397 = vmatpush1.msra.mxu0 %v263
  %398 = vmatprep.subr.mxu0 %v268
  %399 = vmatpush1.msra.mxu0 %v267
  %400 = vmatprep.subr.mxu0 %v272
  %401 = vmatpush1.msra.mxu0 %v271
  %402 = vmatprep.subr.mxu0 %v276
  %403 = vmatpush1.msra.mxu0 %v275
  %404 = vmatprep.subr.mxu0 %v280
  %405 = vmatpush1.msra.mxu0 %v279
  %406 = vmatprep.subr.mxu0 %v284
  %407 = vmatpush1.msra.mxu0 %v283
  %408 = vmatprep.subr.mxu0 %v288
  %409 = vmatpush1.msra.mxu0 %v287
  %410 = vmatprep.subr.mxu0 %v292
  %411 = vmatpush1.msra.mxu0 %v291
  %412 = vmatprep.subr.mxu0 %v296
  %413 = vmatpush1.msra.mxu0 %v295
  %414 = vmatprep.subr.mxu0 %v300
  %415 = vmatpush1.msra.mxu0 %v299
  %416 = vmatprep.subr.mxu0 %v304
  %417 = vmatpush1.msra.mxu0 %v303
  %418 = vmatprep.subr.mxu0 %v308
  %419 = vmatpush1.msra.mxu0 %v307
  %420 = vmatprep.subr.mxu0 %v312
  %421 = vmatpush1.msra.mxu0 %v311
  %422 = vmatprep.subr.mxu0 %v316
  %423 = vmatpush1.msra.mxu0 %v315
  %424 = vmatprep.subr.mxu0 %v320
  %425 = vmatpush1.msra.mxu0 %v319
  %426 = vmatprep.subr.mxu0 %v324
  %427 = vmatpush1.msra.mxu0 %v323
  %428 = vmatprep.subr.mxu0 0.0
  %429 = vmatpush1.msra.mxu0 0.0
  %430 = vmatprep.subr.mxu0 0.0
  %431 = vmatpush1.msra.mxu0 0.0
  %432 = vmatprep.subr.mxu0 0.0
  %433 = vmatpush1.msra.mxu0 0.0
  %434 = vmatprep.subr.mxu0 0.0
  %435 = vmatpush1.msra.mxu0 0.0
  %436 = vmatprep.subr.mxu0 0.0
  %437 = vmatpush1.msra.mxu0 0.0
  %438 = vmatprep.subr.mxu0 0.0
  %439 = vmatpush1.msra.mxu0 0.0
  %440 = vmatprep.subr.mxu0 0.0
  %441 = vmatpush1.msra.mxu0 0.0
  %442 = vmatprep.subr.mxu0 0.0
  %443 = vmatpush1.msra.mxu0 0.0
  %444 = vmatprep.subr.mxu0 0.0
  %445 = vmatpush1.msra.mxu0 0.0
  %446 = vmatprep.subr.mxu0 0.0
  %447 = vmatpush1.msra.mxu0 0.0
  %448 = vmatprep.subr.mxu0 0.0
  %449 = vmatpush1.msra.mxu0 0.0
  %450 = vmatprep.subr.mxu0 0.0
  %451 = vmatpush1.msra.mxu0 0.0
  %452 = vmatprep.subr.mxu0 0.0
  %453 = vmatpush1.msra.mxu0 0.0
  %454 = vmatprep.subr.mxu0 0.0
  %455 = vmatpush1.msra.mxu0 0.0
  %456 = vmatprep.subr.mxu0 0.0
  %457 = vmatpush1.msra.mxu0 0.0
  %458 = vmatprep.subr.mxu0 0.0
  %459 = vmatpush1.msra.mxu0 0.0
  %460 = vmatprep.mubr.f32.mxu0 0.0
  %461 = vmatmul.mubr.f32.gmra.mrb[0].mxu0 0.0
  %v462 = vpop.f32.mrb[0].mxu0
  %v463 = vadd.f32 0.0, %v462
  %v464 = vpop.f32.mrb[0].mxu0
  %v465 = vadd.f32 0.0, %v464
  %466 = vdwg.mxu0
  %v467 = vadd.f32 %v150, %v392
  %v468 = vadd.f32 %v152, %v394
  %v469 = vadd.f32 %v239, %v463
  %v470 = vadd.f32 %v241, %v465
  %v471 = vxor.u32 %v467, 2147483648
  %v472 = vmul.f32 %v471, 1.442695
  %v473 = vpow.pop %v472
  %v474 = vadd.f32 %v473, 1.0
  %v475 = vrcp.pop %v474
  %v476 = vmul.f32 1.0, %v475
  %v477 = vxor.u32 %v468, 2147483648
  %v478 = vmul.f32 %v477, 1.442695
  %v479 = vpow.pop %v478
  %v480 = vadd.f32 %v479, 1.0
  %v481 = vrcp.pop %v480
  %v482 = vmul.f32 1.0, %v481
  %v483 = vtanh.pop %v469
  %v484 = vxor.u32 %v470, 2147483648
  %v485 = vmul.f32 %v484, 1.442695
  %v486 = vpow.pop %v485
  %v487 = vadd.f32 %v486, 1.0
  %v488 = vrcp.pop %v487
  %v489 = vmul.f32 1.0, %v488
  %v490 = vmul.f32 %v482, 0.0
  %v491 = vmul.f32 %v476, %v483
  %v492 = vadd.f32 %v490, %v491
  %v493 = vtanh.pop %v492
  %v494 = vmul.f32 %v489, %v493
  %495 = vmatprep.subr.mxu0 %v262
  %496 = vmatpush1.msra.mxu0 %v261
  %497 = vmatprep.subr.mxu0 %v266
  %498 = vmatpush1.msra.mxu0 %v265
  %499 = vmatprep.subr.mxu0 %v270
  %500 = vmatpush1.msra.mxu0 %v269
  %501 = vmatprep.subr.mxu0 %v274
  %502 = vmatpush1.msra.mxu0 %v273
  %503 = vmatprep.subr.mxu0 %v278
  %504 = vmatpush1.msra.mxu0 %v277
  %505 = vmatprep.subr.mxu0 %v282
  %506 = vmatpush1.msra.mxu0 %v281
  %507 = vmatprep.subr.mxu0 %v286
  %508 = vmatpush1.msra.mxu0 %v285
  %509 = vmatprep.subr.mxu0 %v290
  %510 = vmatpush1.msra.mxu0 %v289
  %511 = vmatprep.subr.mxu0 %v294
  %512 = vmatpush1.msra.mxu0 %v293
  %513 = vmatprep.subr.mxu0 %v298
  %514 = vmatpush1.msra.mxu0 %v297
  %515 = vmatprep.subr.mxu0 %v302
  %516 = vmatpush1.msra.mxu0 %v301
  %517 = vmatprep.subr.mxu0 %v306
  %518 = vmatpush1.msra.mxu0 %v305
  %519 = vmatprep.subr.mxu0 %v310
  %520 = vmatpush1.msra.mxu0 %v309
  %521 = vmatprep.subr.mxu0 %v314
  %522 = vmatpush1.msra.mxu0 %v313
  %523 = vmatprep.subr.mxu0 %v318
  %524 = vmatpush1.msra.mxu0 %v317
  %525 = vmatprep.subr.mxu0 %v322
  %526 = vmatpush1.msra.mxu0 %v321
  %527 = vmatprep.subr.mxu0 0.0
  %528 = vmatpush1.msra.mxu0 0.0
  %529 = vmatprep.subr.mxu0 0.0
  %530 = vmatpush1.msra.mxu0 0.0
  %531 = vmatprep.subr.mxu0 0.0
  %532 = vmatpush1.msra.mxu0 0.0
  %533 = vmatprep.subr.mxu0 0.0
  %534 = vmatpush1.msra.mxu0 0.0
  %535 = vmatprep.subr.mxu0 0.0
  %536 = vmatpush1.msra.mxu0 0.0
  %537 = vmatprep.subr.mxu0 0.0
  %538 = vmatpush1.msra.mxu0 0.0
  %539 = vmatprep.subr.mxu0 0.0
  %540 = vmatpush1.msra.mxu0 0.0
  %541 = vmatprep.subr.mxu0 0.0
  %542 = vmatpush1.msra.mxu0 0.0
  %543 = vmatprep.subr.mxu0 0.0
  %544 = vmatpush1.msra.mxu0 0.0
  %545 = vmatprep.subr.mxu0 0.0
  %546 = vmatpush1.msra.mxu0 0.0
  %547 = vmatprep.subr.mxu0 0.0
  %548 = vmatpush1.msra.mxu0 0.0
  %549 = vmatprep.subr.mxu0 0.0
  %550 = vmatpush1.msra.mxu0 0.0
  %551 = vmatprep.subr.mxu0 0.0
  %552 = vmatpush1.msra.mxu0 0.0
  %553 = vmatprep.subr.mxu0 0.0
  %554 = vmatpush1.msra.mxu0 0.0
  %555 = vmatprep.subr.mxu0 0.0
  %556 = vmatpush1.msra.mxu0 0.0
  %557 = vmatprep.subr.mxu0 0.0
  %558 = vmatpush1.msra.mxu0 0.0
  %559 = vmatprep.mubr.f32.mxu0 0.0
  %560 = vmatmul.mubr.f32.gmra.mrb[0].mxu0 %v494
  %v561 = vpop.f32.mrb[0].mxu0
  %v562 = vadd.f32 0.0, %v561
  %v563 = vpop.f32.mrb[0].mxu0
  %v564 = vadd.f32 0.0, %v563
  %565 = vdwg.mxu0
  %566 = vmatprep.subr.mxu0 %v264
  %567 = vmatpush1.msra.mxu0 %v263
  %568 = vmatprep.subr.mxu0 %v268
  %569 = vmatpush1.msra.mxu0 %v267
  %570 = vmatprep.subr.mxu0 %v272
  %571 = vmatpush1.msra.mxu0 %v271
  %572 = vmatprep.subr.mxu0 %v276
  %573 = vmatpush1.msra.mxu0 %v275
  %574 = vmatprep.subr.mxu0 %v280
  %575 = vmatpush1.msra.mxu0 %v279
  %576 = vmatprep.subr.mxu0 %v284
  %577 = vmatpush1.msra.mxu0 %v283
  %578 = vmatprep.subr.mxu0 %v288
  %579 = vmatpush1.msra.mxu0 %v287
  %580 = vmatprep.subr.mxu0 %v292
  %581 = vmatpush1.msra.mxu0 %v291
  %582 = vmatprep.subr.mxu0 %v296
  %583 = vmatpush1.msra.mxu0 %v295
  %584 = vmatprep.subr.mxu0 %v300
  %585 = vmatpush1.msra.mxu0 %v299
  %586 = vmatprep.subr.mxu0 %v304
  %587 = vmatpush1.msra.mxu0 %v303
  %588 = vmatprep.subr.mxu0 %v308
  %589 = vmatpush1.msra.mxu0 %v307
  %590 = vmatprep.subr.mxu0 %v312
  %591 = vmatpush1.msra.mxu0 %v311
  %592 = vmatprep.subr.mxu0 %v316
  %593 = vmatpush1.msra.mxu0 %v315
  %594 = vmatprep.subr.mxu0 %v320
  %595 = vmatpush1.msra.mxu0 %v319
  %596 = vmatprep.subr.mxu0 %v324
  %597 = vmatpush1.msra.mxu0 %v323
  %598 = vmatprep.subr.mxu0 0.0
  %599 = vmatpush1.msra.mxu0 0.0
  %600 = vmatprep.subr.mxu0 0.0
  %601 = vmatpush1.msra.mxu0 0.0
  %602 = vmatprep.subr.mxu0 0.0
  %603 = vmatpush1.msra.mxu0 0.0
  %604 = vmatprep.subr.mxu0 0.0
  %605 = vmatpush1.msra.mxu0 0.0
  %606 = vmatprep.subr.mxu0 0.0
  %607 = vmatpush1.msra.mxu0 0.0
  %608 = vmatprep.subr.mxu0 0.0
  %609 = vmatpush1.msra.mxu0 0.0
  %610 = vmatprep.subr.mxu0 0.0
  %611 = vmatpush1.msra.mxu0 0.0
  %612 = vmatprep.subr.mxu0 0.0
  %613 = vmatpush1.msra.mxu0 0.0
  %614 = vmatprep.subr.mxu0 0.0
  %615 = vmatpush1.msra.mxu0 0.0
  %616 = vmatprep.subr.mxu0 0.0
  %617 = vmatpush1.msra.mxu0 0.0
  %618 = vmatprep.subr.mxu0 0.0
  %619 = vmatpush1.msra.mxu0 0.0
  %620 = vmatprep.subr.mxu0 0.0
  %621 = vmatpush1.msra.mxu0 0.0
  %622 = vmatprep.subr.mxu0 0.0
  %623 = vmatpush1.msra.mxu0 0.0
  %624 = vmatprep.subr.mxu0 0.0
  %625 = vmatpush1.msra.mxu0 0.0
  %626 = vmatprep.subr.mxu0 0.0
  %627 = vmatpush1.msra.mxu0 0.0
  %628 = vmatprep.subr.mxu0 0.0
  %629 = vmatpush1.msra.mxu0 0.0
  %630 = vmatprep.mubr.f32.mxu0 0.0
  %631 = vmatmul.mubr.f32.gmra.mrb[0].mxu0 %v494
  %v632 = vpop.f32.mrb[0].mxu0
  %v633 = vadd.f32 0.0, %v632
  %v634 = vpop.f32.mrb[0].mxu0
  %v635 = vadd.f32 0.0, %v634
  %636 = vdwg.mxu0
  %v637 = vadd.f32 %v156, %v562
  %v638 = vadd.f32 %v158, %v564
  %v639 = vadd.f32 %v245, %v633
  %v640 = vadd.f32 %v247, %v635
  %v641 = vxor.u32 %v637, 2147483648
  %v642 = vmul.f32 %v641, 1.442695
  %v643 = vpow.pop %v642
  %v644 = vadd.f32 %v643, 1.0
  %v645 = vrcp.pop %v644
  %v646 = vmul.f32 1.0, %v645
  %v647 = vxor.u32 %v638, 2147483648
  %v648 = vmul.f32 %v647, 1.442695
  %v649 = vpow.pop %v648
  %v650 = vadd.f32 %v649, 1.0
  %v651 = vrcp.pop %v650
  %v652 = vmul.f32 1.0, %v651
  %v653 = vtanh.pop %v639
  %v654 = vxor.u32 %v640, 2147483648
  %v655 = vmul.f32 %v654, 1.442695
  %v656 = vpow.pop %v655
  %v657 = vadd.f32 %v656, 1.0
  %v658 = vrcp.pop %v657
  %v659 = vmul.f32 1.0, %v658
  %v660 = vmul.f32 %v652, %v492
  %v661 = vmul.f32 %v646, %v653
  %v662 = vadd.f32 %v660, %v661
  %v663 = vtanh.pop %v662
  %v664 = vmul.f32 %v659, %v663
  %665 = vmatprep.subr.mxu0 %v262
  %666 = vmatpush1.msra.mxu0 %v261
  %667 = vmatprep.subr.mxu0 %v266
  %668 = vmatpush1.msra.mxu0 %v265
  %669 = vmatprep.subr.mxu0 %v270
  %670 = vmatpush1.msra.mxu0 %v269
  %671 = vmatprep.subr.mxu0 %v274
  %672 = vmatpush1.msra.mxu0 %v273
  %673 = vmatprep.subr.mxu0 %v278
  %674 = vmatpush1.msra.mxu0 %v277
  %675 = vmatprep.subr.mxu0 %v282
  %676 = vmatpush1.msra.mxu0 %v281
  %677 = vmatprep.subr.mxu0 %v286
  %678 = vmatpush1.msra.mxu0 %v285
  %679 = vmatprep.subr.mxu0 %v290
  %680 = vmatpush1.msra.mxu0 %v289
  %681 = vmatprep.subr.mxu0 %v294
  %682 = vmatpush1.msra.mxu0 %v293
  %683 = vmatprep.subr.mxu0 %v298
  %684 = vmatpush1.msra.mxu0 %v297
  %685 = vmatprep.subr.mxu0 %v302
  %686 = vmatpush1.msra.mxu0 %v301
  %687 = vmatprep.subr.mxu0 %v306
  %688 = vmatpush1.msra.mxu0 %v305
  %689 = vmatprep.subr.mxu0 %v310
  %690 = vmatpush1.msra.mxu0 %v309
  %691 = vmatprep.subr.mxu0 %v314
  %692 = vmatpush1.msra.mxu0 %v313
  %693 = vmatprep.subr.mxu0 %v318
  %694 = vmatpush1.msra.mxu0 %v317
  %695 = vmatprep.subr.mxu0 %v322
  %696 = vmatpush1.msra.mxu0 %v321
  %697 = vmatprep.subr.mxu0 0.0
  %698 = vmatpush1.msra.mxu0 0.0
  %699 = vmatprep.subr.mxu0 0.0
  %700 = vmatpush1.msra.mxu0 0.0
  %701 = vmatprep.subr.mxu0 0.0
  %702 = vmatpush1.msra.mxu0 0.0
  %703 = vmatprep.subr.mxu0 0.0
  %704 = vmatpush1.msra.mxu0 0.0
  %705 = vmatprep.subr.mxu0 0.0
  %706 = vmatpush1.msra.mxu0 0.0
  %707 = vmatprep.subr.mxu0 0.0
  %708 = vmatpush1.msra.mxu0 0.0
  %709 = vmatprep.subr.mxu0 0.0
  %710 = vmatpush1.msra.mxu0 0.0
  %711 = vmatprep.subr.mxu0 0.0
  %712 = vmatpush1.msra.mxu0 0.0
  %713 = vmatprep.subr.mxu0 0.0
  %714 = vmatpush1.msra.mxu0 0.0
  %715 = vmatprep.subr.mxu0 0.0
  %716 = vmatpush1.msra.mxu0 0.0
  %717 = vmatprep.subr.mxu0 0.0
  %718 = vmatpush1.msra.mxu0 0.0
  %719 = vmatprep.subr.mxu0 0.0
  %720 = vmatpush1.msra.mxu0 0.0
  %721 = vmatprep.subr.mxu0 0.0
  %722 = vmatpush1.msra.mxu0 0.0
  %723 = vmatprep.subr.mxu0 0.0
  %724 = vmatpush1.msra.mxu0 0.0
  %725 = vmatprep.subr.mxu0 0.0
  %726 = vmatpush1.msra.mxu0 0.0
  %727 = vmatprep.subr.mxu0 0.0
  %728 = vmatpush1.msra.mxu0 0.0
  %729 = vmatprep.mubr.f32.mxu0 0.0
  %730 = vmatmul.mubr.f32.gmra.mrb[0].mxu0 %v664
  %v731 = vpop.f32.mrb[0].mxu0
  %v732 = vadd.f32 0.0, %v731
  %v733 = vpop.f32.mrb[0].mxu0
  %v734 = vadd.f32 0.0, %v733
  %735 = vdwg.mxu0
  %736 = vmatprep.subr.mxu0 %v264
  %737 = vmatpush1.msra.mxu0 %v263
  %738 = vmatprep.subr.mxu0 %v268
  %739 = vmatpush1.msra.mxu0 %v267
  %740 = vmatprep.subr.mxu0 %v272
  %741 = vmatpush1.msra.mxu0 %v271
  %742 = vmatprep.subr.mxu0 %v276
  %743 = vmatpush1.msra.mxu0 %v275
  %744 = vmatprep.subr.mxu0 %v280
  %745 = vmatpush1.msra.mxu0 %v279
  %746 = vmatprep.subr.mxu0 %v284
  %747 = vmatpush1.msra.mxu0 %v283
  %748 = vmatprep.subr.mxu0 %v288
  %749 = vmatpush1.msra.mxu0 %v287
  %750 = vmatprep.subr.mxu0 %v292
  %751 = vmatpush1.msra.mxu0 %v291
  %752 = vmatprep.subr.mxu0 %v296
  %753 = vmatpush1.msra.mxu0 %v295
  %754 = vmatprep.subr.mxu0 %v300
  %755 = vmatpush1.msra.mxu0 %v299
  %756 = vmatprep.subr.mxu0 %v304
  %757 = vmatpush1.msra.mxu0 %v303
  %758 = vmatprep.subr.mxu0 %v308
  %759 = vmatpush1.msra.mxu0 %v307
  %760 = vmatprep.subr.mxu0 %v312
  %761 = vmatpush1.msra.mxu0 %v311
  %762 = vmatprep.subr.mxu0 %v316
  %763 = vmatpush1.msra.mxu0 %v315
  %764 = vmatprep.subr.mxu0 %v320
  %765 = vmatpush1.msra.mxu0 %v319
  %766 = vmatprep.subr.mxu0 %v324
  %767 = vmatpush1.msra.mxu0 %v323
  %768 = vmatprep.subr.mxu0 0.0
  %769 = vmatpush1.msra.mxu0 0.0
  %770 = vmatprep.subr.mxu0 0.0
  %771 = vmatpush1.msra.mxu0 0.0
  %772 = vmatprep.subr.mxu0 0.0
  %773 = vmatpush1.msra.mxu0 0.0
  %774 = vmatprep.subr.mxu0 0.0
  %775 = vmatpush1.msra.mxu0 0.0
  %776 = vmatprep.subr.mxu0 0.0
  %777 = vmatpush1.msra.mxu0 0.0
  %778 = vmatprep.subr.mxu0 0.0
  %779 = vmatpush1.msra.mxu0 0.0
  %780 = vmatprep.subr.mxu0 0.0
  %781 = vmatpush1.msra.mxu0 0.0
  %782 = vmatprep.subr.mxu0 0.0
  %783 = vmatpush1.msra.mxu0 0.0
  %784 = vmatprep.subr.mxu0 0.0
  %785 = vmatpush1.msra.mxu0 0.0
  %786 = vmatprep.subr.mxu0 0.0
  %787 = vmatpush1.msra.mxu0 0.0
  %788 = vmatprep.subr.mxu0 0.0
  %789 = vmatpush1.msra.mxu0 0.0
  %790 = vmatprep.subr.mxu0 0.0
  %791 = vmatpush1.msra.mxu0 0.0
  %792 = vmatprep.subr.mxu0 0.0
  %793 = vmatpush1.msra.mxu0 0.0
  %794 = vmatprep.subr.mxu0 0.0
  %795 = vmatpush1.msra.mxu0 0.0
  %796 = vmatprep.subr.mxu0 0.0
  %797 = vmatpush1.msra.mxu0 0.0
  %798 = vmatprep.subr.mxu0 0.0
  %799 = vmatpush1.msra.mxu0 0.0
  %800 = vmatprep.mubr.f32.mxu0 0.0
  %801 = vmatmul.mubr.f32.gmra.mrb[0].mxu0 %v664
  %v802 = vpop.f32.mrb[0].mxu0
  %v803 = vadd.f32 0.0, %v802
  %v804 = vpop.f32.mrb[0].mxu0
  %v805 = vadd.f32 0.0, %v804
  %806 = vdwg.mxu0
  %v807 = vadd.f32 %v162, %v732
  %v808 = vadd.f32 %v164, %v734
  %v809 = vadd.f32 %v251, %v803
  %v810 = vadd.f32 %v253, %v805
  %v811 = vxor.u32 %v807, 2147483648
  %v812 = vmul.f32 %v811, 1.442695
  %v813 = vpow.pop %v812
  %v814 = vadd.f32 %v813, 1.0
  %v815 = vrcp.pop %v814
  %v816 = vmul.f32 1.0, %v815
  %v817 = vxor.u32 %v808, 2147483648
  %v818 = vmul.f32 %v817, 1.442695
  %v819 = vpow.pop %v818
  %v820 = vadd.f32 %v819, 1.0
  %v821 = vrcp.pop %v820
  %v822 = vmul.f32 1.0, %v821
  %v823 = vtanh.pop %v809
  %v824 = vxor.u32 %v810, 2147483648
  %v825 = vmul.f32 %v824, 1.442695
  %v826 = vpow.pop %v825
  %v827 = vadd.f32 %v826, 1.0
  %v828 = vrcp.pop %v827
  %v829 = vmul.f32 1.0, %v828
  %v830 = vmul.f32 %v822, %v662
  %v831 = vmul.f32 %v816, %v823
  %v832 = vadd.f32 %v830, %v831
  %v833 = vtanh.pop %v832
  %v834 = vmul.f32 %v829, %v833
  %835 = vmatprep.subr.mxu0 %v262
  %836 = vmatpush1.msra.mxu0 %v261
  %837 = vmatprep.subr.mxu0 %v266
  %838 = vmatpush1.msra.mxu0 %v265
  %839 = vmatprep.subr.mxu0 %v270
  %840 = vmatpush1.msra.mxu0 %v269
  %841 = vmatprep.subr.mxu0 %v274
  %842 = vmatpush1.msra.mxu0 %v273
  %843 = vmatprep.subr.mxu0 %v278
  %844 = vmatpush1.msra.mxu0 %v277
  %845 = vmatprep.subr.mxu0 %v282
  %846 = vmatpush1.msra.mxu0 %v281
  %847 = vmatprep.subr.mxu0 %v286
  %848 = vmatpush1.msra.mxu0 %v285
  %849 = vmatprep.subr.mxu0 %v290
  %850 = vmatpush1.msra.mxu0 %v289
  %851 = vmatprep.subr.mxu0 %v294
  %852 = vmatpush1.msra.mxu0 %v293
  %853 = vmatprep.subr.mxu0 %v298
  %854 = vmatpush1.msra.mxu0 %v297
  %855 = vmatprep.subr.mxu0 %v302
  %856 = vmatpush1.msra.mxu0 %v301
  %857 = vmatprep.subr.mxu0 %v306
  %858 = vmatpush1.msra.mxu0 %v305
  %859 = vmatprep.subr.mxu0 %v310
  %860 = vmatpush1.msra.mxu0 %v309
  %861 = vmatprep.subr.mxu0 %v314
  %862 = vmatpush1.msra.mxu0 %v313
  %863 = vmatprep.subr.mxu0 %v318
  %864 = vmatpush1.msra.mxu0 %v317
  %865 = vmatprep.subr.mxu0 %v322
  %866 = vmatpush1.msra.mxu0 %v321
  %867 = vmatprep.subr.mxu0 0.0
  %868 = vmatpush1.msra.mxu0 0.0
  %869 = vmatprep.subr.mxu0 0.0
  %870 = vmatpush1.msra.mxu0 0.0
  %871 = vmatprep.subr.mxu0 0.0
  %872 = vmatpush1.msra.mxu0 0.0
  %873 = vmatprep.subr.mxu0 0.0
  %874 = vmatpush1.msra.mxu0 0.0
  %875 = vmatprep.subr.mxu0 0.0
  %876 = vmatpush1.msra.mxu0 0.0
  %877 = vmatprep.subr.mxu0 0.0
  %878 = vmatpush1.msra.mxu0 0.0
  %879 = vmatprep.subr.mxu0 0.0
  %880 = vmatpush1.msra.mxu0 0.0
  %881 = vmatprep.subr.mxu0 0.0
  %882 = vmatpush1.msra.mxu0 0.0
  %883 = vmatprep.subr.mxu0 0.0
  %884 = vmatpush1.msra.mxu0 0.0
  %885 = vmatprep.subr.mxu0 0.0
  %886 = vmatpush1.msra.mxu0 0.0
  %887 = vmatprep.subr.mxu0 0.0
  %888 = vmatpush1.msra.mxu0 0.0
  %889 = vmatprep.subr.mxu0 0.0
  %890 = vmatpush1.msra.mxu0 0.0
  %891 = vmatprep.subr.mxu0 0.0
  %892 = vmatpush1.msra.mxu0 0.0
  %893 = vmatprep.subr.mxu0 0.0
  %894 = vmatpush1.msra.mxu0 0.0
  %895 = vmatprep.subr.mxu0 0.0
  %896 = vmatpush1.msra.mxu0 0.0
  %897 = vmatprep.subr.mxu0 0.0
  %898 = vmatpush1.msra.mxu0 0.0
  %899 = vmatprep.mubr.f32.mxu0 0.0
  %900 = vmatmul.mubr.f32.gmra.mrb[0].mxu0 %v834
  %v901 = vpop.f32.mrb[0].mxu0
  %v902 = vadd.f32 0.0, %v901
  %v903 = vpop.f32.mrb[0].mxu0
  %v904 = vadd.f32 0.0, %v903
  %905 = vdwg.mxu0
  %906 = vmatprep.subr.mxu0 %v264
  %907 = vmatpush1.msra.mxu0 %v263
  %908 = vmatprep.subr.mxu0 %v268
  %909 = vmatpush1.msra.mxu0 %v267
  %910 = vmatprep.subr.mxu0 %v272
  %911 = vmatpush1.msra.mxu0 %v271
  %912 = vmatprep.subr.mxu0 %v276
  %913 = vmatpush1.msra.mxu0 %v275
  %914 = vmatprep.subr.mxu0 %v280
  %915 = vmatpush1.msra.mxu0 %v279
  %916 = vmatprep.subr.mxu0 %v284
  %917 = vmatpush1.msra.mxu0 %v283
  %918 = vmatprep.subr.mxu0 %v288
  %919 = vmatpush1.msra.mxu0 %v287
  %920 = vmatprep.subr.mxu0 %v292
  %921 = vmatpush1.msra.mxu0 %v291
  %922 = vmatprep.subr.mxu0 %v296
  %923 = vmatpush1.msra.mxu0 %v295
  %924 = vmatprep.subr.mxu0 %v300
  %925 = vmatpush1.msra.mxu0 %v299
  %926 = vmatprep.subr.mxu0 %v304
  %927 = vmatpush1.msra.mxu0 %v303
  %928 = vmatprep.subr.mxu0 %v308
  %929 = vmatpush1.msra.mxu0 %v307
  %930 = vmatprep.subr.mxu0 %v312
  %931 = vmatpush1.msra.mxu0 %v311
  %932 = vmatprep.subr.mxu0 %v316
  %933 = vmatpush1.msra.mxu0 %v315
  %934 = vmatprep.subr.mxu0 %v320
  %935 = vmatpush1.msra.mxu0 %v319
  %936 = vmatprep.subr.mxu0 %v324
  %937 = vmatpush1.msra.mxu0 %v323
  %938 = vmatprep.subr.mxu0 0.0
  %939 = vmatpush1.msra.mxu0 0.0
  %940 = vmatprep.subr.mxu0 0.0
  %941 = vmatpush1.msra.mxu0 0.0
  %942 = vmatprep.subr.mxu0 0.0
  %943 = vmatpush1.msra.mxu0 0.0
  %944 = vmatprep.subr.mxu0 0.0
  %945 = vmatpush1.msra.mxu0 0.0
  %946 = vmatprep.subr.mxu0 0.0
  %947 = vmatpush1.msra.mxu0 0.0
  %948 = vmatprep.subr.mxu0 0.0
  %949 = vmatpush1.msra.mxu0 0.0
  %950 = vmatprep.subr.mxu0 0.0
  %951 = vmatpush1.msra.mxu0 0.0
  %952 = vmatprep.subr.mxu0 0.0
  %953 = vmatpush1.msra.mxu0 0.0
  %954 = vmatprep.subr.mxu0 0.0
  %955 = vmatpush1.msra.mxu0 0.0
  %956 = vmatprep.subr.mxu0 0.0
  %957 = vmatpush1.msra.mxu0 0.0
  %958 = vmatprep.subr.mxu0 0.0
  %959 = vmatpush1.msra.mxu0 0.0
  %960 = vmatprep.subr.mxu0 0.0
  %961 = vmatpush1.msra.mxu0 0.0
  %962 = vmatprep.subr.mxu0 0.0
  %963 = vmatpush1.msra.mxu0 0.0
  %964 = vmatprep.subr.mxu0 0.0
  %965 = vmatpush1.msra.mxu0 0.0
  %966 = vmatprep.subr.mxu0 0.0
  %967 = vmatpush1.msra.mxu0 0.0
  %968 = vmatprep.subr.mxu0 0.0
  %969 = vmatpush1.msra.mxu0 0.0
  %970 = vmatprep.mubr.f32.mxu0 0.0
  %971 = vmatmul.mubr.f32.gmra.mrb[0].mxu0 %v834
  %v972 = vpop.f32.mrb[0].mxu0
  %v973 = vadd.f32 0.0, %v972
  %v974 = vpop.f32.mrb[0].mxu0
  %v975 = vadd.f32 0.0, %v974
  %976 = vdwg.mxu0
  %v977 = vadd.f32 %v168, %v902
  %v978 = vadd.f32 %v170, %v904
  %v979 = vadd.f32 %v257, %v973
  %v980 = vadd.f32 %v259, %v975
  %v981 = vxor.u32 %v977, 2147483648
  %v982 = vmul.f32 %v981, 1.442695
  %v983 = vpow.pop %v982
  %v984 = vadd.f32 %v983, 1.0
  %v985 = vrcp.pop %v984
  %v986 = vmul.f32 1.0, %v985
  %v987 = vxor.u32 %v978, 2147483648
  %v988 = vmul.f32 %v987, 1.442695
  %v989 = vpow.pop %v988
  %v990 = vadd.f32 %v989, 1.0
  %v991 = vrcp.pop %v990
  %v992 = vmul.f32 1.0, %v991
  %v993 = vtanh.pop %v979
  %v994 = vxor.u32 %v980, 2147483648
  %v995 = vmul.f32 %v994, 1.442695
  %v996 = vpow.pop %v995
  %v997 = vadd.f32 %v996, 1.0
  %v998 = vrcp.pop %v997
  %v999 = vmul.f32 1.0, %v998
  %v1000 = vmul.f32 %v992, %v832
  %v1001 = vmul.f32 %v986, %v993
  %v1002 = vadd.f32 %v1000, %v1001
  %v1003 = vtanh.pop %v1002
  %v1004 = vmul.f32 %v999, %v1003
  %v1005 = vld [vmem:[%s4] sm:$0xff]
  %v1006 = vld [vmem:[%s4 + $0x8] sm:$0xff]
  %v1007 = vld [vmem:[%s4 + $0x10] sm:$0xff]
  %v1008 = vld [vmem:[%s4 + $0x18] sm:$0xff]
  %v1009 = vld [vmem:[%s4 + $0x20] sm:$0xff]
  %v1010 = vld [vmem:[%s4 + $0x28] sm:$0xff]
  %v1011 = vld [vmem:[%s4 + $0x30] sm:$0xff]
  %v1012 = vld [vmem:[%s4 + $0x38] sm:$0xff]
  %v1013 = vld [vmem:[%s4 + $0x40] sm:$0xff]
  %v1014 = vld [vmem:[%s4 + $0x48] sm:$0xff]
  %v1015 = vld [vmem:[%s4 + $0x50] sm:$0xff]
  %v1016 = vld [vmem:[%s4 + $0x58] sm:$0xff]
  %v1017 = vld [vmem:[%s4 + $0x60] sm:$0xff]
  %v1018 = vld [vmem:[%s4 + $0x68] sm:$0xff]
  %v1019 = vld [vmem:[%s4 + $0x70] sm:$0xff]
  %v1020 = vld [vmem:[%s4 + $0x78] sm:$0xff]
  %v1021 = vld [vmem:[%s5] sm:$0x1]
  %v1023 = vlaneseq
  %v1024 = vshrl.u32 %v1023, 7
  %v1025 = vsub.s32 0, %v1024
  %v1026 = vrot.slane %v1021, %v1025
  %1028 = vmatprep.subr.mxu0 0.0
  %1029 = vmatpush1.msra.mxu0 %v1005
  %1030 = vmatprep.subr.mxu0 0.0
  %1031 = vmatpush1.msra.mxu0 %v1006
  %1032 = vmatprep.subr.mxu0 0.0
  %1033 = vmatpush1.msra.mxu0 %v1007
  %1034 = vmatprep.subr.mxu0 0.0
  %1035 = vmatpush1.msra.mxu0 %v1008
  %1036 = vmatprep.subr.mxu0 0.0
  %1037 = vmatpush1.msra.mxu0 %v1009
  %1038 = vmatprep.subr.mxu0 0.0
  %1039 = vmatpush1.msra.mxu0 %v1010
  %1040 = vmatprep.subr.mxu0 0.0
  %1041 = vmatpush1.msra.mxu0 %v1011
  %1042 = vmatprep.subr.mxu0 0.0
  %1043 = vmatpush1.msra.mxu0 %v1012
  %1044 = vmatprep.subr.mxu0 0.0
  %1045 = vmatpush1.msra.mxu0 %v1013
  %1046 = vmatprep.subr.mxu0 0.0
  %1047 = vmatpush1.msra.mxu0 %v1014
  %1048 = vmatprep.subr.mxu0 0.0
  %1049 = vmatpush1.msra.mxu0 %v1015
  %1050 = vmatprep.subr.mxu0 0.0
  %1051 = vmatpush1.msra.mxu0 %v1016
  %1052 = vmatprep.subr.mxu0 0.0
  %1053 = vmatpush1.msra.mxu0 %v1017
  %1054 = vmatprep.subr.mxu0 0.0
  %1055 = vmatpush1.msra.mxu0 %v1018
  %1056 = vmatprep.subr.mxu0 0.0
  %1057 = vmatpush1.msra.mxu0 %v1019
  %1058 = vmatprep.subr.mxu0 0.0
  %1059 = vmatpush1.msra.mxu0 %v1020
  %1060 = vmatprep.subr.mxu0 0.0
  %1061 = vmatpush1.msra.mxu0 0.0
  %1062 = vmatprep.subr.mxu0 0.0
  %1063 = vmatpush1.msra.mxu0 0.0
  %1064 = vmatprep.subr.mxu0 0.0
  %1065 = vmatpush1.msra.mxu0 0.0
  %1066 = vmatprep.subr.mxu0 0.0
  %1067 = vmatpush1.msra.mxu0 0.0
  %1068 = vmatprep.subr.mxu0 0.0
  %1069 = vmatpush1.msra.mxu0 0.0
  %1070 = vmatprep.subr.mxu0 0.0
  %1071 = vmatpush1.msra.mxu0 0.0
  %1072 = vmatprep.subr.mxu0 0.0
  %1073 = vmatpush1.msra.mxu0 0.0
  %1074 = vmatprep.subr.mxu0 0.0
  %1075 = vmatpush1.msra.mxu0 0.0
  %1076 = vmatprep.subr.mxu0 0.0
  %1077 = vmatpush1.msra.mxu0 0.0
  %1078 = vmatprep.subr.mxu0 0.0
  %1079 = vmatpush1.msra.mxu0 0.0
  %1080 = vmatprep.subr.mxu0 0.0
  %1081 = vmatpush1.msra.mxu0 0.0
  %1082 = vmatprep.subr.mxu0 0.0
  %1083 = vmatpush1.msra.mxu0 0.0
  %1084 = vmatprep.subr.mxu0 0.0
  %1085 = vmatpush1.msra.mxu0 0.0
  %1086 = vmatprep.subr.mxu0 0.0
  %1087 = vmatpush1.msra.mxu0 0.0
  %1088 = vmatprep.subr.mxu0 0.0
  %1089 = vmatpush1.msra.mxu0 0.0
  %1090 = vmatprep.subr.mxu0 0.0
  %1091 = vmatpush1.msra.mxu0 0.0
  %1092 = vmatprep.mubr.f32.mxu0 0.0
  %1093 = vmatmul.mubr.f32.gmra.mrb[0].mxu0 %v494
  %v1094 = vpop.f32.mrb[0].mxu0
  %v1095 = vadd.f32 %v1026, %v1094
  %v1096 = vpop.f32.mrb[0].mxu0
  %1097 = vmatprep.mubr.f32.mxu0 0.0
  %1098 = vmatmul.mubr.f32.gmra.mrb[0].mxu0 %v664
  %v1099 = vpop.f32.mrb[0].mxu0
  %v1100 = vadd.f32 %v1026, %v1099
  %v1101 = vpop.f32.mrb[0].mxu0
  %1102 = vmatprep.mubr.f32.mxu0 0.0
  %1103 = vmatmul.mubr.f32.gmra.mrb[0].mxu0 %v834
  %v1104 = vpop.f32.mrb[0].mxu0
  %v1105 = vadd.f32 %v1026, %v1104
  %v1106 = vpop.f32.mrb[0].mxu0
  %1107 = vmatprep.mubr.f32.mxu0 0.0
  %1108 = vmatmul.mubr.f32.gmra.mrb[0].mxu0 %v1004
  %v1109 = vpop.f32.mrb[0].mxu0
  %v1110 = vadd.f32 %v1026, %v1109
  %v1111 = vpop.f32.mrb[0].mxu0
  %1112 = vdwg.mxu0
  %v1113 = vlaneseq
  %v1114 = vand.u32 %v1113, 127
  %vm1115 = vcmp.lt.s32.totalorder %v1114, 10
  %v1116 = vsel %vm1115, %v1095, -1e+30
  %v1117 = vsel %vm1115, %v1100, -1e+30
  %v1118 = vsel %vm1115, %v1105, -1e+30
  %v1119 = vsel %vm1115, %v1110, -1e+30
  %1120 = vmax.xlane.f32.xlu0 %v1116
  %v1121 = vpop.xlane.xlu0 %1120
  %1122 = vmax.xlane.f32.xlu0 %v1117
  %v1123 = vpop.xlane.xlu0 %1122
  %1124 = vmax.xlane.f32.xlu0 %v1118
  %v1125 = vpop.xlane.xlu0 %1124
  %1126 = vmax.xlane.f32.xlu0 %v1119
  %v1127 = vpop.xlane.xlu0 %1126
  %v1128 = vsub.f32 %v1116, %v1121
  %v1129 = vsub.f32 %v1117, %v1123
  %v1130 = vsub.f32 %v1118, %v1125
  %v1131 = vsub.f32 %v1119, %v1127
  %v1132 = vmul.f32 %v1128, 1.442695
  %v1133 = vpow.pop %v1132
  %v1134 = vmul.f32 %v1129, 1.442695
  %v1135 = vpow.pop %v1134
  %v1136 = vmul.f32 %v1130, 1.442695
  %v1137 = vpow.pop %v1136
  %v1138 = vmul.f32 %v1131, 1.442695
  %v1139 = vpow.pop %v1138
  %1140 = vadd.xlane.f32.xlu0 %v1133
  %v1141 = vpop.xlane.xlu0 %1140
  %1142 = vadd.xlane.f32.xlu0 %v1135
  %v1143 = vpop.xlane.xlu0 %1142
  %1144 = vadd.xlane.f32.xlu0 %v1137
  %v1145 = vpop.xlane.xlu0 %1144
  %1146 = vadd.xlane.f32.xlu0 %v1139
  %v1147 = vpop.xlane.xlu0 %1146
  %v1148 = vlog2.pop %v1141
  %v1149 = vmul.f32 %v1148, 0.6931472
  %v1150 = vlog2.pop %v1143
  %v1151 = vmul.f32 %v1150, 0.6931472
  %v1152 = vlog2.pop %v1145
  %v1153 = vmul.f32 %v1152, 0.6931472
  %v1154 = vlog2.pop %v1147
  %v1155 = vmul.f32 %v1154, 0.6931472
  %v1156 = vsub.f32 %v1128, %v1149
  %v1157 = vsub.f32 %v1129, %v1151
  %v1158 = vsub.f32 %v1130, %v1153
  %v1159 = vsub.f32 %v1131, %v1155
  %v1161 = vcombine.high %v1156, %v1156
  %v1163 = vunpack.c.l.s4 1966171168
  %v1164 = vunpack.c.0.s8 %v1163
  %v1165 = vlaneseq
  %v1166 = vshrl.u32 %v1165, 7
  %v1167 = vsub.s32 %v1164, %v1166
  %v1168 = vrot.slane %v1156, %v1167
  %v1170 = vunpack.c.l.s4 1966171168
  %v1171 = vunpack.c.0.s8 %v1170
  %v1172 = vlaneseq
  %v1173 = vshrl.u32 %v1172, 7
  %v1174 = vsub.s32 %v1171, %v1173
  %v1175 = vrot.slane %v1161, %v1174
  %v1176 = vcombine.high %v1168, %v1168
  %v1177 = vcombine.high %v1175, %v1175
  %v1179 = vunpack.c.l.s4 1966171168
  %v1180 = vunpack.c.0.s8 %v1179
  %v1181 = vlaneseq
  %v1182 = vshrl.u32 %v1181, 7
  %v1183 = vsub.s32 %v1180, %v1182
  %v1184 = vrot.slane %v1168, %v1183
  %v1186 = vunpack.c.l.s4 1966171168
  %v1187 = vunpack.c.0.s8 %v1186
  %v1188 = vlaneseq
  %v1189 = vshrl.u32 %v1188, 7
  %v1190 = vsub.s32 %v1187, %v1189
  %v1191 = vrot.slane %v1175, %v1190
  %v1193 = vunpack.c.l.s4 1966171168
  %v1194 = vunpack.c.0.s8 %v1193
  %v1195 = vlaneseq
  %v1196 = vshrl.u32 %v1195, 7
  %v1197 = vsub.s32 %v1194, %v1196
  %v1198 = vrot.slane %v1176, %v1197
  %v1200 = vunpack.c.l.s4 1966171168
  %v1201 = vunpack.c.0.s8 %v1200
  %v1202 = vlaneseq
  %v1203 = vshrl.u32 %v1202, 7
  %v1204 = vsub.s32 %v1201, %v1203
  %v1205 = vrot.slane %v1177, %v1204
  %v1206 = vcombine.high %v1184, %v1184
  %v1207 = vcombine.high %v1191, %v1191
  %v1208 = vcombine.high %v1198, %v1198
  %v1209 = vcombine.high %v1205, %v1205
  %1218 = vst [vmem:[%s6] sm:$0x1] %v1184
  %1219 = vst [vmem:[%s6 + $0x4] sm:$0x1] %v1198
  %1220 = vst [vmem:[%s6 + $0x8] sm:$0x1] %v1206
  %1221 = vst [vmem:[%s6 + $0xc] sm:$0x1] %v1208
  %1222 = vst [vmem:[%s6 + $0x10] sm:$0x1] %v1191
  %1223 = vst [vmem:[%s6 + $0x14] sm:$0x1] %v1205
  %1224 = vst [vmem:[%s6 + $0x18] sm:$0x1] %v1207
  %1225 = vst [vmem:[%s6 + $0x1c] sm:$0x1] %v1209
  %v1227 = vcombine.high %v1157, %v1157
  %v1229 = vunpack.c.l.s4 1966171168
  %v1230 = vunpack.c.0.s8 %v1229
  %v1231 = vlaneseq
  %v1232 = vshrl.u32 %v1231, 7
  %v1233 = vsub.s32 %v1230, %v1232
  %v1234 = vrot.slane %v1157, %v1233
  %v1236 = vunpack.c.l.s4 1966171168
  %v1237 = vunpack.c.0.s8 %v1236
  %v1238 = vlaneseq
  %v1239 = vshrl.u32 %v1238, 7
  %v1240 = vsub.s32 %v1237, %v1239
  %v1241 = vrot.slane %v1227, %v1240
  %v1242 = vcombine.high %v1234, %v1234
  %v1243 = vcombine.high %v1241, %v1241
  %v1245 = vunpack.c.l.s4 1966171168
  %v1246 = vunpack.c.0.s8 %v1245
  %v1247 = vlaneseq
  %v1248 = vshrl.u32 %v1247, 7
  %v1249 = vsub.s32 %v1246, %v1248
  %v1250 = vrot.slane %v1234, %v1249
  %v1252 = vunpack.c.l.s4 1966171168
  %v1253 = vunpack.c.0.s8 %v1252
  %v1254 = vlaneseq
  %v1255 = vshrl.u32 %v1254, 7
  %v1256 = vsub.s32 %v1253, %v1255
  %v1257 = vrot.slane %v1241, %v1256
  %v1259 = vunpack.c.l.s4 1966171168
  %v1260 = vunpack.c.0.s8 %v1259
  %v1261 = vlaneseq
  %v1262 = vshrl.u32 %v1261, 7
  %v1263 = vsub.s32 %v1260, %v1262
  %v1264 = vrot.slane %v1242, %v1263
  %v1266 = vunpack.c.l.s4 1966171168
  %v1267 = vunpack.c.0.s8 %v1266
  %v1268 = vlaneseq
  %v1269 = vshrl.u32 %v1268, 7
  %v1270 = vsub.s32 %v1267, %v1269
  %v1271 = vrot.slane %v1243, %v1270
  %v1272 = vcombine.high %v1250, %v1250
  %v1273 = vcombine.high %v1257, %v1257
  %v1274 = vcombine.high %v1264, %v1264
  %v1275 = vcombine.high %v1271, %v1271
  %1284 = vst [vmem:[%s6 + $0x1] sm:$0x1] %v1250
  %1285 = vst [vmem:[%s6 + $0x5] sm:$0x1] %v1264
  %1286 = vst [vmem:[%s6 + $0x9] sm:$0x1] %v1272
  %1287 = vst [vmem:[%s6 + $0xd] sm:$0x1] %v1274
  %1288 = vst [vmem:[%s6 + $0x11] sm:$0x1] %v1257
  %1289 = vst [vmem:[%s6 + $0x15] sm:$0x1] %v1271
  %1290 = vst [vmem:[%s6 + $0x19] sm:$0x1] %v1273
  %1291 = vst [vmem:[%s6 + $0x1d] sm:$0x1] %v1275
  %v1293 = vcombine.high %v1158, %v1158
  %v1295 = vunpack.c.l.s4 1966171168
  %v1296 = vunpack.c.0.s8 %v1295
  %v1297 = vlaneseq
  %v1298 = vshrl.u32 %v1297, 7
  %v1299 = vsub.s32 %v1296, %v1298
  %v1300 = vrot.slane %v1158, %v1299
  %v1302 = vunpack.c.l.s4 1966171168
  %v1303 = vunpack.c.0.s8 %v1302
  %v1304 = vlaneseq
  %v1305 = vshrl.u32 %v1304, 7
  %v1306 = vsub.s32 %v1303, %v1305
  %v1307 = vrot.slane %v1293, %v1306
  %v1308 = vcombine.high %v1300, %v1300
  %v1309 = vcombine.high %v1307, %v1307
  %v1311 = vunpack.c.l.s4 1966171168
  %v1312 = vunpack.c.0.s8 %v1311
  %v1313 = vlaneseq
  %v1314 = vshrl.u32 %v1313, 7
  %v1315 = vsub.s32 %v1312, %v1314
  %v1316 = vrot.slane %v1300, %v1315
  %v1318 = vunpack.c.l.s4 1966171168
  %v1319 = vunpack.c.0.s8 %v1318
  %v1320 = vlaneseq
  %v1321 = vshrl.u32 %v1320, 7
  %v1322 = vsub.s32 %v1319, %v1321
  %v1323 = vrot.slane %v1307, %v1322
  %v1325 = vunpack.c.l.s4 1966171168
  %v1326 = vunpack.c.0.s8 %v1325
  %v1327 = vlaneseq
  %v1328 = vshrl.u32 %v1327, 7
  %v1329 = vsub.s32 %v1326, %v1328
  %v1330 = vrot.slane %v1308, %v1329
  %v1332 = vunpack.c.l.s4 1966171168
  %v1333 = vunpack.c.0.s8 %v1332
  %v1334 = vlaneseq
  %v1335 = vshrl.u32 %v1334, 7
  %v1336 = vsub.s32 %v1333, %v1335
  %v1337 = vrot.slane %v1309, %v1336
  %v1338 = vcombine.high %v1316, %v1316
  %v1339 = vcombine.high %v1323, %v1323
  %v1340 = vcombine.high %v1330, %v1330
  %v1341 = vcombine.high %v1337, %v1337
  %1350 = vst [vmem:[%s6 + $0x2] sm:$0x1] %v1316
  %1351 = vst [vmem:[%s6 + $0x6] sm:$0x1] %v1330
  %1352 = vst [vmem:[%s6 + $0xa] sm:$0x1] %v1338
  %1353 = vst [vmem:[%s6 + $0xe] sm:$0x1] %v1340
  %1354 = vst [vmem:[%s6 + $0x12] sm:$0x1] %v1323
  %1355 = vst [vmem:[%s6 + $0x16] sm:$0x1] %v1337
  %1356 = vst [vmem:[%s6 + $0x1a] sm:$0x1] %v1339
  %1357 = vst [vmem:[%s6 + $0x1e] sm:$0x1] %v1341
  %v1359 = vcombine.high %v1159, %v1159
  %v1361 = vunpack.c.l.s4 1966171168
  %v1362 = vunpack.c.0.s8 %v1361
  %v1363 = vlaneseq
  %v1364 = vshrl.u32 %v1363, 7
  %v1365 = vsub.s32 %v1362, %v1364
  %v1366 = vrot.slane %v1159, %v1365
  %v1368 = vunpack.c.l.s4 1966171168
  %v1369 = vunpack.c.0.s8 %v1368
  %v1370 = vlaneseq
  %v1371 = vshrl.u32 %v1370, 7
  %v1372 = vsub.s32 %v1369, %v1371
  %v1373 = vrot.slane %v1359, %v1372
  %v1374 = vcombine.high %v1366, %v1366
  %v1375 = vcombine.high %v1373, %v1373
  %v1377 = vunpack.c.l.s4 1966171168
  %v1378 = vunpack.c.0.s8 %v1377
  %v1379 = vlaneseq
  %v1380 = vshrl.u32 %v1379, 7
  %v1381 = vsub.s32 %v1378, %v1380
  %v1382 = vrot.slane %v1366, %v1381
  %v1384 = vunpack.c.l.s4 1966171168
  %v1385 = vunpack.c.0.s8 %v1384
  %v1386 = vlaneseq
  %v1387 = vshrl.u32 %v1386, 7
  %v1388 = vsub.s32 %v1385, %v1387
  %v1389 = vrot.slane %v1373, %v1388
  %v1391 = vunpack.c.l.s4 1966171168
  %v1392 = vunpack.c.0.s8 %v1391
  %v1393 = vlaneseq
  %v1394 = vshrl.u32 %v1393, 7
  %v1395 = vsub.s32 %v1392, %v1394
  %v1396 = vrot.slane %v1374, %v1395
  %v1398 = vunpack.c.l.s4 1966171168
  %v1399 = vunpack.c.0.s8 %v1398
  %v1400 = vlaneseq
  %v1401 = vshrl.u32 %v1400, 7
  %v1402 = vsub.s32 %v1399, %v1401
  %v1403 = vrot.slane %v1375, %v1402
  %v1404 = vcombine.high %v1382, %v1382
  %v1405 = vcombine.high %v1389, %v1389
  %v1406 = vcombine.high %v1396, %v1396
  %v1407 = vcombine.high %v1403, %v1403
  %1416 = vst [vmem:[%s6 + $0x3] sm:$0x1] %v1382
  %1417 = vst [vmem:[%s6 + $0x7] sm:$0x1] %v1396
  %1418 = vst [vmem:[%s6 + $0xb] sm:$0x1] %v1404
  %1419 = vst [vmem:[%s6 + $0xf] sm:$0x1] %v1406
  %1420 = vst [vmem:[%s6 + $0x13] sm:$0x1] %v1389
  %1421 = vst [vmem:[%s6 + $0x17] sm:$0x1] %v1403
  %1422 = vst [vmem:[%s6 + $0x1b] sm:$0x1] %v1405
  %1423 = vst [vmem:[%s6 + $0x1f] sm:$0x1] %v1407
  // Predicated region
  $region26: #{module_id_based_rnn_forward.1} parent=0 // pred_check
    _
  $region27: #{module_id_based_rnn_forward.1} parent=0 // pred_check_branch
    %1425 = sbr.rel (0) target = $region29
  $region28: #{module_id_based_rnn_forward.1} parent=0 // pred_region
    _
  $region29: #{module_id_based_rnn_forward.1} parent=0 // pred_fallthru
    _
  // Predicated region
  $region30: #{module_id_based_rnn_forward.1} parent=0 // pred_check
    _
  $region31: #{module_id_based_rnn_forward.1} parent=0 // pred_check_branch
    %1427 = sbr.rel (0) target = $region33
  $region32: #{module_id_based_rnn_forward.1} parent=0 // pred_region
    _
  $region33: #{module_id_based_rnn_forward.1} parent=0 // pred_fallthru
    _

</llo_original>
